<compile_context>
chip_gen: v7x
topology: tpu7x:2x2x1
jax: 0.10.0
libtpu: 0.0.40
codegen_flags: <defaults>
</compile_context>

<pallas_src>
import functools

import jax
import jax.numpy as jnp
from jax.experimental import pallas as pl
from jax.experimental.pallas import tpu as pltpu

EPS = 1e-5
TM = 128       # node-tile size (sublane aligned; works on v5e/v6e/v7x)
               # TODO(synk): raise TM to 256 on v6e/v7x (256x256 MXU M-fill) once
               #             a reliable generation probe is available.
C_PAD = 128    # unified lane-dense channel width (features 4 / hidden 32 / classes 3)


def _round_up(n, m):
    return (n + m - 1) // m * m


def _pad_to(a, shape):
    return jnp.pad(a, [(0, t - s) for s, t in zip(a.shape, shape)])


@functools.lru_cache(maxsize=1)
def _vmem_budget():
    """Per-generation VMEM budget: ~75% of physical (96 MiB on v5e/v6e, 48 MiB on v7x)."""
    try:
        cap = int(pltpu.get_tpu_info().vmem_capacity_bytes)
    except Exception:
        cap = 64 * 1024 * 1024
    return max(32 * 1024 * 1024, (cap * 3) // 4)


# ------------------------------ fused kernel -------------------------------- #

def _gnn_fused_kernel(x_ref, a_ref, p_ref, w_ref, b_ref, g_ref, be_ref,
                      wl_ref, bl_ref, o_ref, h_act, h_pre, s_sum, s_sq,
                      *, inv_n, n_valid, a_resident):
    # grid = (layer, node_tile); layer 0 = input Linear+BN0+ReLU, layers >=1 are
    # GraphConv+BN+ReLU.  h_act (bf16 scratch) is the resident activation.
    l = pl.program_id(0)
    i = pl.program_id(1)
    n_layers = pl.num_programs(0)
    n_tiles = pl.num_programs(1)

    @pl.when(i == 0)
    def _():
        s_sum[...] = jnp.zeros_like(s_sum)
        s_sq[...] = jnp.zeros_like(s_sq)

    row0 = pl.multiple_of(i * TM, TM)
    # validity mask generated in-kernel (padded rows excluded from BN stats)
    rows = row0 + jax.lax.broadcasted_iota(jnp.int32, (TM, 1), 0)
    valid = rows < n_valid

    w_root = w_ref[0, C_PAD:, :]                      # [C, C] bf16 (static ref slice)
    bias = b_ref[0]                                   # [1, C] f32

    def accumulate(h_t):
        # masked BN stat accumulation (f32) + bf16 pre-BN store
        hm = jnp.where(valid, h_t, 0.0)
        s_sum[...] += jnp.sum(hm, axis=0, keepdims=True)
        s_sq[...] += jnp.sum(hm * h_t, axis=0, keepdims=True)
        h_pre[pl.ds(row0, TM), :] = h_t.astype(h_pre.dtype)

    @pl.when(l == 0)
    def _():
        # input stage: h = x @ W0^T + b0  (rel slot of w_stack[0] unused)
        x_tile = x_ref[pl.ds(row0, TM), :]
        h_t = jnp.dot(x_tile, w_root, preferred_element_type=jnp.float32) + bias
        accumulate(h_t)

    @pl.when(l > 0)
    def _():
        # GraphConv: out = (A @ h) @ Wrel^T + h_i @ Wroot^T + b_rel
        h_all = h_act[...]                            # [N_pad, C] bf16 (resident)
        x_tile = h_act[pl.ds(row0, TM), :]            # [TM, C] bf16 (root input)
        if a_resident:
            a_blk = a_ref[pl.ds(row0, TM), :]         # slice of resident A
        else:
            a_blk = a_ref[...]                        # streamed (TM, N_pad) row-block
        aggr = jnp.dot(a_blk, h_all, preferred_element_type=jnp.float32)
        w_rel = w_ref[0, :C_PAD, :]
        # two accumulated K=128 dots (no (TM, 256) concat intermediate)
        h_t = (jnp.dot(aggr.astype(jnp.bfloat16), w_rel,
                       preferred_element_type=jnp.float32)
               + jnp.dot(x_tile, w_root, preferred_element_type=jnp.float32)
               + bias)
        accumulate(h_t)

    @pl.when(i == n_tiles - 1)
    def _():
        # finalize training-mode BN over all valid nodes for this layer, apply
        # ReLU, and update the resident activation.
        # NOTE: E[x^2]-E[x]^2 in f32; clamped at 0 (see perf-review caveat).
        mean = s_sum[...] * inv_n
        var = jnp.maximum(s_sq[...] * inv_n - mean * mean, 0.0)
        scale = jax.lax.rsqrt(var + EPS) * g_ref[0]
        shift = be_ref[0] - mean * scale
        y = jnp.maximum(h_pre[...].astype(jnp.float32) * scale + shift, 0.0)
        h_act[...] = y.astype(h_act.dtype)

        @pl.when(l == n_layers - 1)
        def _():
            # fused global_mean_pool + final Linear head (bf16 MXU, f32 accumulate)
            pooled = jnp.dot(p_ref[...], y.astype(jnp.bfloat16),
                             preferred_element_type=jnp.float32)
            o_ref[...] = (jnp.dot(pooled, wl_ref[...],
                                  preferred_element_type=jnp.float32)
                          + bl_ref[...])


# ----------------------------- parameters ----------------------------------- #

def init_params(key, num_node_features, hidden_channels, num_classes, num_layers):
    """Deterministic synthetic parameters (shapes match the torch module)."""
    def nxt():
        nonlocal key
        key, k = jax.random.split(key)
        return k

    def linear(in_f, out_f, bias=True):
        w = 0.1 * jax.random.normal(nxt(), (out_f, in_f), jnp.float32)
        b = 0.1 * jax.random.normal(nxt(), (1, out_f), jnp.float32) if bias else None
        return w, b

    def bn(c):
        gamma = 1.0 + 0.1 * jax.random.normal(nxt(), (1, c), jnp.float32)
        beta = 0.1 * jax.random.normal(nxt(), (1, c), jnp.float32)
        return gamma, beta

    def graphconv(in_f, out_f):
        w_rel, b_rel = linear(in_f, out_f, bias=True)
        w_root, _ = linear(in_f, out_f, bias=False)
        return {"w_rel": w_rel, "b_rel": b_rel, "w_root": w_root}

    return {
        "linear": linear(num_node_features, num_node_features),
        "bn0": bn(num_node_features),
        "conv1": graphconv(num_node_features, hidden_channels), "bn1": bn(hidden_channels),
        "conv2": graphconv(hidden_channels, hidden_channels), "bn2": bn(hidden_channels),
        "conv3": graphconv(hidden_channels, hidden_channels), "bn3": bn(hidden_channels),
        "conv_extra": [graphconv(hidden_channels, hidden_channels) for _ in range(num_layers)],
        "bn_extra": [bn(hidden_channels) for _ in range(num_layers)],
        "lin": linear(hidden_channels, num_classes),
    }


def prepare_params(p):
    """One-time prep: transpose, pad to lane-dense C_PAD, stack per-layer (the
    input linear is layer 0 of the stack, in the root slot), cast matmul weights
    to bf16.  Zero-padded channels stay exactly zero through every layer."""
    layers_w, layers_b, layers_g, layers_be = [], [], [], []

    w0, b0 = p["linear"]
    w0t = _pad_to(w0.T, (C_PAD, C_PAD))
    layers_w.append(jnp.concatenate([jnp.zeros((C_PAD, C_PAD), jnp.float32), w0t], axis=0))
    layers_b.append(_pad_to(b0, (1, C_PAD)))
    layers_g.append(_pad_to(p["bn0"][0], (1, C_PAD)))
    layers_be.append(_pad_to(p["bn0"][1], (1, C_PAD)))

    convs = [p["conv1"], p["conv2"], p["conv3"]] + list(p["conv_extra"])
    bns = [p["bn1"], p["bn2"], p["bn3"]] + list(p["bn_extra"])
    for conv, bn in zip(convs, bns):
        wrel_t = _pad_to(conv["w_rel"].T, (C_PAD, C_PAD))
        wroot_t = _pad_to(conv["w_root"].T, (C_PAD, C_PAD))
        layers_w.append(jnp.concatenate([wrel_t, wroot_t], axis=0))
        layers_b.append(_pad_to(conv["b_rel"], (1, C_PAD)))
        layers_g.append(_pad_to(bn[0], (1, C_PAD)))
        layers_be.append(_pad_to(bn[1], (1, C_PAD)))

    wl, bl = p["lin"]
    return {
        "w_stack": jnp.stack(layers_w).astype(jnp.bfloat16),   # [L+1, 2*C_PAD, C_PAD]
        "b_stack": jnp.stack(layers_b),                        # [L+1, 1, C_PAD] f32
        "g_stack": jnp.stack(layers_g),
        "be_stack": jnp.stack(layers_be),
        "wlt": _pad_to(wl.T, (C_PAD, C_PAD)),                  # head kept f32 (tiny)
        "bl": _pad_to(bl, (1, C_PAD)),
    }


def prepare_graph(x, edge_index, batch, num_graphs):
    """One-time (per static graph) prep outside the jitted forward: padded bf16
    node features, dense bf16 aggregation matrix A[i,j] = #edges j->i, and the
    bf16 mean-pool matrix P[g,i] = 1/|graph g|."""
    n, f = x.shape
    n_pad = _round_up(max(n, TM), TM)
    x_pad = (jnp.zeros((n_pad, C_PAD), jnp.float32)
             .at[:n, :f].set(x.astype(jnp.float32)).astype(jnp.bfloat16))

    # Edge multiplicities <= 256 stay exact in bf16; accumulation is f32 in-kernel.
    # TODO(synk): replace dense A with a scalar-prefetched CSR gather kernel for
    #             sparse graphs (E << N^2); dense path is fine for small/dense graphs.
    src, dst = edge_index[0], edge_index[1]
    adj = (jnp.zeros((n_pad, n_pad), jnp.float32)
           .at[dst, src].add(1.0)).astype(jnp.bfloat16)

    g_pad = _round_up(max(num_graphs, 8), 8)
    onehot = (batch[None, :] == jnp.arange(num_graphs)[:, None]).astype(jnp.float32)
    counts = jnp.maximum(onehot.sum(axis=1, keepdims=True), 1.0)
    pool = (jnp.zeros((g_pad, n_pad), jnp.float32)
            .at[:num_graphs, :n].set(onehot / counts).astype(jnp.bfloat16))
    return x_pad, adj, pool, n


# ------------------------------- forward ------------------------------------ #

@functools.partial(jax.jit, static_argnames=("n_valid", "num_graphs", "num_classes"))
def gnn_forward(x_pad, adj, pool, prep, *, n_valid, num_graphs, num_classes):
    n_pad = x_pad.shape[0]
    g_pad = pool.shape[0]
    n_stages = prep["w_stack"].shape[0]      # 1 input stage + all GraphConv layers
    n_tiles = n_pad // TM
    vmem_limit = _vmem_budget()

    # Resident-A decision (estimate assumes default double-buffering of
    # constant-index blocks).
    # TODO(synk): single-buffer constant-index blocks with pipeline_mode=pl.Buffered(1)
    #             to roughly double the resident-A graph-size threshold.
    resident_bytes = (
        2 * n_pad * n_pad * 2                # adjacency (bf16, x2 buffers)
        + 2 * n_pad * C_PAD * 2              # resident x (bf16, x2)
        + 2 * g_pad * n_pad * 2              # pool matrix (bf16, x2)
        + 2 * n_pad * C_PAD * 2              # h_act + h_pre scratch (bf16)
        + 2 * (2 * C_PAD * C_PAD * 2)        # streamed per-layer weights (x2)
        + 2 * C_PAD * C_PAD * 4)             # head weights (f32, x2)
    a_resident = resident_bytes <= int(vmem_limit * 0.8)

    if a_resident:
        a_spec = pl.BlockSpec((n_pad, n_pad), lambda l, i: (0, 0))
        a_bytes = n_pad * n_pad * 2
    else:
        a_spec = pl.BlockSpec((TM, n_pad), lambda l, i: (i, 0))
        a_bytes = n_stages * n_pad * n_pad * 2

    kernel = functools.partial(_gnn_fused_kernel, inv_n=1.0 / n_valid,
                               n_valid=n_valid, a_resident=a_resident)

    flops = ((n_stages - 1) * 2 * n_pad * n_pad * C_PAD          # aggregation matmuls
             + n_stages * 2 * n_pad * (2 * C_PAD) * C_PAD        # projections
             + 2 * g_pad * n_pad * C_PAD                         # pooling
             + 2 * g_pad * C_PAD * C_PAD)                        # head
    bytes_accessed = (a_bytes
                      + n_pad * C_PAD * 2                        # x in
                      + g_pad * n_pad * 2                        # pool in
                      + n_stages * (2 * C_PAD * C_PAD * 2 + 3 * C_PAD * 4)
                      + C_PAD * C_PAD * 4 + g_pad * C_PAD * 4)   # head + out

    out = pl.pallas_call(
        kernel,
        out_shape=jax.ShapeDtypeStruct((g_pad, C_PAD), jnp.float32),
        grid_spec=pltpu.PrefetchScalarGridSpec(
            num_scalar_prefetch=0,
            grid=(n_stages, n_tiles),        # layer axis outer, node-tile axis inner
            in_specs=[
                pl.BlockSpec((n_pad, C_PAD), lambda l, i: (0, 0)),           # x (resident)
                a_spec,                                                      # adjacency
                pl.BlockSpec((g_pad, n_pad), lambda l, i: (0, 0)),           # pool (resident)
                pl.BlockSpec((1, 2 * C_PAD, C_PAD), lambda l, i: (l, 0, 0)),  # [Wrel^T;Wroot^T]
                pl.BlockSpec((1, 1, C_PAD), lambda l, i: (l, 0, 0)),         # bias
                pl.BlockSpec((1, 1, C_PAD), lambda l, i: (l, 0, 0)),         # gamma
                pl.BlockSpec((1, 1, C_PAD), lambda l, i: (l, 0, 0)),         # beta
                pl.BlockSpec((C_PAD, C_PAD), lambda l, i: (0, 0)),           # head W^T
                pl.BlockSpec((1, C_PAD), lambda l, i: (0, 0)),               # head bias
            ],
            out_specs=pl.BlockSpec((g_pad, C_PAD), lambda l, i: (0, 0)),
            scratch_shapes=[
                pltpu.VMEM((n_pad, C_PAD), jnp.bfloat16),   # resident activation h
                pltpu.VMEM((n_pad, C_PAD), jnp.bfloat16),   # pre-BN h (bf16)
                pltpu.VMEM((1, C_PAD), jnp.float32),        # BN sum
                pltpu.VMEM((1, C_PAD), jnp.float32),        # BN sum of squares
            ]),
        compiler_params=pltpu.CompilerParams(
            # both axes carry state (resident h, BN accumulators) -> sequential
            dimension_semantics=("arbitrary", "arbitrary"),
            vmem_limit_bytes=vmem_limit),
        cost_estimate=pl.CostEstimate(flops=int(flops), transcendentals=0,
                                      bytes_accessed=int(bytes_accessed)),
    )(x_pad, adj, pool, prep["w_stack"], prep["b_stack"],
      prep["g_stack"], prep["be_stack"], prep["wlt"], prep["bl"])

    return out[:num_graphs, :num_classes]


# --------------------------------- main -------------------------------------- #

if __name__ == "__main__":
    NUM_NODE_FEATURES = 4
    HIDDEN_CHANNELS = 32
    NUM_CLASSES = 3
    NUM_LAYERS = 2
    NUM_NODES = 8
    NUM_GRAPHS = 2

    key = jax.random.PRNGKey(0)
    key, kx, kp = jax.random.split(key, 3)

    # Two ring graphs of 4 nodes each, bidirectional edges.
    src = jnp.array([0, 1, 2, 3, 1, 2, 3, 0, 4, 5, 6, 7, 5, 6, 7, 4], jnp.int32)
    dst = jnp.array([1, 2, 3, 0, 0, 1, 2, 3, 5, 6, 7, 4, 4, 5, 6, 7], jnp.int32)
    edge_index = jnp.stack([src, dst])
    batch = jnp.array([0, 0, 0, 0, 1, 1, 1, 1], jnp.int32)

    x = jax.random.normal(kx, (NUM_NODES, NUM_NODE_FEATURES), jnp.float32)
    params = init_params(kp, NUM_NODE_FEATURES, HIDDEN_CHANNELS, NUM_CLASSES, NUM_LAYERS)
    prep = prepare_params(params)
    x_pad, adj, pool, n_valid = prepare_graph(x, edge_index, batch, NUM_GRAPHS)

    out = gnn_forward(x_pad, adj, pool, prep,
                      n_valid=n_valid, num_graphs=NUM_GRAPHS, num_classes=NUM_CLASSES)
    jax.block_until_ready(out)
    assert out.shape == (NUM_GRAPHS, NUM_CLASSES)
    assert bool(jnp.all(jnp.isfinite(out)))
    print("KERNEL_OK")
</pallas_src>

<mosaic_0001>
module attributes {stable_mosaic.version = 11 : i64} {
  func.func @_gnn_fused_kernel(%arg0: i32, %arg1: i32, %arg2: memref<128x128xbf16, #tpu.memory_space<vmem>>, %arg3: memref<128x128xbf16, #tpu.memory_space<vmem>>, %arg4: memref<8x128xbf16, #tpu.memory_space<vmem>>, %arg5: memref<1x256x128xbf16, #tpu.memory_space<vmem>>, %arg6: memref<1x1x128xf32, #tpu.memory_space<vmem>>, %arg7: memref<1x1x128xf32, #tpu.memory_space<vmem>>, %arg8: memref<1x1x128xf32, #tpu.memory_space<vmem>>, %arg9: memref<128x128xf32, #tpu.memory_space<vmem>>, %arg10: memref<1x128xf32, #tpu.memory_space<vmem>>, %arg11: memref<8x128xf32, #tpu.memory_space<vmem>>, %arg12: memref<128x128xbf16, #tpu.memory_space<vmem>>, %arg13: memref<128x128xbf16, #tpu.memory_space<vmem>>, %arg14: memref<1x128xf32, #tpu.memory_space<vmem>>, %arg15: memref<1x128xf32, #tpu.memory_space<vmem>>) attributes {dimension_semantics = [#tpu.dimension_semantics<arbitrary>, #tpu.dimension_semantics<arbitrary>], iteration_bounds = array<i64: 6, 1>, scalar_prefetch = 0 : i64, scratch_operands = 4 : i64, tpu.core_type = #tpu.core_type<tc>, window_params = [{pipeline_mode = #tpu.pipeline_mode<synchronous>, transform_indices = @transform_0, window_bounds = array<i64: 128, 128>}, {pipeline_mode = #tpu.pipeline_mode<synchronous>, transform_indices = @transform_1, window_bounds = array<i64: 128, 128>}, {pipeline_mode = #tpu.pipeline_mode<synchronous>, transform_indices = @transform_2, window_bounds = array<i64: 8, 128>}, {transform_indices = @transform_3, window_bounds = array<i64: 1, 256, 128>}, {transform_indices = @transform_4, window_bounds = array<i64: 1, 1, 128>}, {transform_indices = @transform_5, window_bounds = array<i64: 1, 1, 128>}, {transform_indices = @transform_6, window_bounds = array<i64: 1, 1, 128>}, {pipeline_mode = #tpu.pipeline_mode<synchronous>, transform_indices = @transform_7, window_bounds = array<i64: 128, 128>}, {pipeline_mode = #tpu.pipeline_mode<synchronous>, transform_indices = @transform_8, window_bounds = array<i64: 1, 128>}, {pipeline_mode = #tpu.pipeline_mode<synchronous>, transform_indices = @transform_9, window_bounds = array<i64: 8, 128>}]} {
    %c0_i32 = arith.constant 0 : i32
    %0 = arith.cmpi eq, %arg1, %c0_i32 : i32
    %1 = arith.extui %0 : i1 to i32
    %c0_i32_0 = arith.constant 0 : i32
    %2 = arith.cmpi ne, %1, %c0_i32_0 : i32
    scf.if %2 {
      %cst = arith.constant 0.000000e+00 : f32
      %23 = vector.broadcast %cst : f32 to vector<1x128xf32>
      %c0_11 = arith.constant 0 : index
      %c0_12 = arith.constant 0 : index
      %24 = vector.load %arg14[%c0_11, %c0_12] : memref<1x128xf32, #tpu.memory_space<vmem>>, vector<1x128xf32>
      tpu.vector_store %arg14[%c0_11, %c0_12], %23 {strides = array<i32>} : memref<1x128xf32, #tpu.memory_space<vmem>>, vector<1x128xf32>,
      %cst_13 = arith.constant 0.000000e+00 : f32
      %25 = vector.broadcast %cst_13 : f32 to vector<1x128xf32>
      %c0_14 = arith.constant 0 : index
      %c0_15 = arith.constant 0 : index
      %26 = vector.load %arg15[%c0_14, %c0_15] : memref<1x128xf32, #tpu.memory_space<vmem>>, vector<1x128xf32>
      tpu.vector_store %arg15[%c0_14, %c0_15], %25 {strides = array<i32>} : memref<1x128xf32, #tpu.memory_space<vmem>>, vector<1x128xf32>,
    } else {
    }
    %c128_i32 = arith.constant 128 : i32
    %3 = arith.muli %arg1, %c128_i32 : i32
    %4 = tpu.assume_multiple %3, 128 : i32
    %5 = tpu.iota {dimensions = array<i32: 0>} : vector<128x1xi32>
    %6 = vector.broadcast %4 : i32 to vector<128x1xi32>
    %7 = arith.addi %6, %5 : vector<128x1xi32>
    %c8_i32 = arith.constant 8 : i32
    %8 = vector.broadcast %c8_i32 : i32 to vector<128x1xi32>
    %9 = arith.cmpi slt, %7, %8 : vector<128x1xi32>
    %c0 = arith.constant 0 : index
    %c128 = arith.constant 128 : index
    %c0_1 = arith.constant 0 : index
    %10 = vector.load %arg5[%c0, %c128, %c0_1] : memref<1x256x128xbf16, #tpu.memory_space<vmem>>, vector<1x128x128xbf16>
    %11 = vector.shape_cast %10 : vector<1x128x128xbf16> to vector<128x128xbf16>
    %c0_2 = arith.constant 0 : index
    %c0_3 = arith.constant 0 : index
    %c0_4 = arith.constant 0 : index
    %12 = vector.load %arg6[%c0_2, %c0_3, %c0_4] : memref<1x1x128xf32, #tpu.memory_space<vmem>>, vector<1x1x128xf32>
    %13 = vector.shape_cast %12 : vector<1x1x128xf32> to vector<1x128xf32>
    %c0_i32_5 = arith.constant 0 : i32
    %14 = arith.cmpi eq, %arg0, %c0_i32_5 : i32
    %15 = arith.extui %14 : i1 to i32
    %c0_i32_6 = arith.constant 0 : i32
    %16 = arith.cmpi ne, %15, %c0_i32_6 : i32
    scf.if %16 {
      %23 = arith.index_cast %4 : i32 to index
      %c0_11 = arith.constant 0 : index
      %24 = vector.load %arg2[%23, %c0_11] : memref<128x128xbf16, #tpu.memory_space<vmem>>, vector<128x128xbf16>
      %cst = arith.constant dense<0.000000e+00> : vector<128x128xf32>
      %25 = tpu.matmul %24, %11, %cst {dimension_numbers = #tpu.dot_dimension_numbers<[1], [0], [0], [1], [0, 0, 1, 1], [], []>} : vector<128x128xbf16>, vector<128x128xbf16>, vector<128x128xf32> -> vector<128x128xf32>
      %26 = vector.broadcast %13 : vector<1x128xf32> to vector<128x128xf32>
      %27 = arith.addf %25, %26 : vector<128x128xf32>
      %cst_12 = arith.constant 0.000000e+00 : f32
      %28 = vector.shape_cast %9 : vector<128x1xi1> to vector<128x1xi1>
      %29 = vector.broadcast %28 : vector<128x1xi1> to vector<128x128xi1>
      %30 = vector.broadcast %cst_12 : f32 to vector<128x128xf32>
      %31 = arith.select %29, %27, %30 : vector<128x128xi1>, vector<128x128xf32>
      %c0_13 = arith.constant 0 : index
      %c0_14 = arith.constant 0 : index
      %32 = vector.load %arg14[%c0_13, %c0_14] : memref<1x128xf32, #tpu.memory_space<vmem>>, vector<1x128xf32>
      %cst_15 = arith.constant dense<0.000000e+00> : vector<128xf32>
      %33 = vector.multi_reduction <add>, %31, %cst_15 [0] : vector<128x128xf32> to vector<128xf32>
      %34 = vector.shape_cast %33 : vector<128xf32> to vector<1x128xf32>
      %35 = arith.addf %32, %34 : vector<1x128xf32>
      %c0_16 = arith.constant 0 : index
      %c0_17 = arith.constant 0 : index
      %36 = vector.load %arg14[%c0_16, %c0_17] : memref<1x128xf32, #tpu.memory_space<vmem>>, vector<1x128xf32>
      tpu.vector_store %arg14[%c0_16, %c0_17], %35 {strides = array<i32>} : memref<1x128xf32, #tpu.memory_space<vmem>>, vector<1x128xf32>,
      %c0_18 = arith.constant 0 : index
      %c0_19 = arith.constant 0 : index
      %37 = vector.load %arg15[%c0_18, %c0_19] : memref<1x128xf32, #tpu.memory_space<vmem>>, vector<1x128xf32>
      %38 = arith.mulf %31, %27 : vector<128x128xf32>
      %cst_20 = arith.constant dense<0.000000e+00> : vector<128xf32>
      %39 = vector.multi_reduction <add>, %38, %cst_20 [0] : vector<128x128xf32> to vector<128xf32>
      %40 = vector.shape_cast %39 : vector<128xf32> to vector<1x128xf32>
      %41 = arith.addf %37, %40 : vector<1x128xf32>
      %c0_21 = arith.constant 0 : index
      %c0_22 = arith.constant 0 : index
      %42 = vector.load %arg15[%c0_21, %c0_22] : memref<1x128xf32, #tpu.memory_space<vmem>>, vector<1x128xf32>
      tpu.vector_store %arg15[%c0_21, %c0_22], %41 {strides = array<i32>} : memref<1x128xf32, #tpu.memory_space<vmem>>, vector<1x128xf32>,
      %43 = arith.truncf %27 : vector<128x128xf32> to vector<128x128xbf16>
      %44 = arith.index_cast %4 : i32 to index
      %c0_23 = arith.constant 0 : index
      %45 = vector.load %arg13[%44, %c0_23] : memref<128x128xbf16, #tpu.memory_space<vmem>>, vector<128x128xbf16>
      tpu.vector_store %arg13[%44, %c0_23], %43 {strides = array<i32>} : memref<128x128xbf16, #tpu.memory_space<vmem>>, vector<128x128xbf16>,
    } else {
    }
    %c0_i32_7 = arith.constant 0 : i32
    %17 = arith.cmpi sgt, %arg0, %c0_i32_7 : i32
    %18 = arith.extui %17 : i1 to i32
    %c0_i32_8 = arith.constant 0 : i32
    %19 = arith.cmpi ne, %18, %c0_i32_8 : i32
    scf.if %19 {
      %c0_11 = arith.constant 0 : index
      %c0_12 = arith.constant 0 : index
      %23 = vector.load %arg12[%c0_11, %c0_12] : memref<128x128xbf16, #tpu.memory_space<vmem>>, vector<128x128xbf16>
      %24 = arith.index_cast %4 : i32 to index
      %c0_13 = arith.constant 0 : index
      %25 = vector.load %arg12[%24, %c0_13] : memref<128x128xbf16, #tpu.memory_space<vmem>>, vector<128x128xbf16>
      %26 = arith.index_cast %4 : i32 to index
      %c0_14 = arith.constant 0 : index
      %27 = vector.load %arg3[%26, %c0_14] : memref<128x128xbf16, #tpu.memory_space<vmem>>, vector<128x128xbf16>
      %cst = arith.constant dense<0.000000e+00> : vector<128x128xf32>
      %28 = tpu.matmul %27, %23, %cst {dimension_numbers = #tpu.dot_dimension_numbers<[1], [0], [0], [1], [0, 0, 1, 1], [], []>} : vector<128x128xbf16>, vector<128x128xbf16>, vector<128x128xf32> -> vector<128x128xf32>
      %c0_15 = arith.constant 0 : index
      %c0_16 = arith.constant 0 : index
      %c0_17 = arith.constant 0 : index
      %29 = vector.load %arg5[%c0_15, %c0_16, %c0_17] : memref<1x256x128xbf16, #tpu.memory_space<vmem>>, vector<1x128x128xbf16>
      %30 = vector.shape_cast %29 : vector<1x128x128xbf16> to vector<128x128xbf16>
      %31 = arith.truncf %28 : vector<128x128xf32> to vector<128x128xbf16>
      %cst_18 = arith.constant dense<0.000000e+00> : vector<128x128xf32>
      %32 = tpu.matmul %31, %30, %cst_18 {dimension_numbers = #tpu.dot_dimension_numbers<[1], [0], [0], [1], [0, 0, 1, 1], [], []>} : vector<128x128xbf16>, vector<128x128xbf16>, vector<128x128xf32> -> vector<128x128xf32>
      %cst_19 = arith.constant dense<0.000000e+00> : vector<128x128xf32>
      %33 = tpu.matmul %25, %11, %cst_19 {dimension_numbers = #tpu.dot_dimension_numbers<[1], [0], [0], [1], [0, 0, 1, 1], [], []>} : vector<128x128xbf16>, vector<128x128xbf16>, vector<128x128xf32> -> vector<128x128xf32>
      %34 = arith.addf %32, %33 : vector<128x128xf32>
      %35 = vector.broadcast %13 : vector<1x128xf32> to vector<128x128xf32>
      %36 = arith.addf %34, %35 : vector<128x128xf32>
      %cst_20 = arith.constant 0.000000e+00 : f32
      %37 = vector.shape_cast %9 : vector<128x1xi1> to vector<128x1xi1>
      %38 = vector.broadcast %37 : vector<128x1xi1> to vector<128x128xi1>
      %39 = vector.broadcast %cst_20 : f32 to vector<128x128xf32>
      %40 = arith.select %38, %36, %39 : vector<128x128xi1>, vector<128x128xf32>
      %c0_21 = arith.constant 0 : index
      %c0_22 = arith.constant 0 : index
      %41 = vector.load %arg14[%c0_21, %c0_22] : memref<1x128xf32, #tpu.memory_space<vmem>>, vector<1x128xf32>
      %cst_23 = arith.constant dense<0.000000e+00> : vector<128xf32>
      %42 = vector.multi_reduction <add>, %40, %cst_23 [0] : vector<128x128xf32> to vector<128xf32>
      %43 = vector.shape_cast %42 : vector<128xf32> to vector<1x128xf32>
      %44 = arith.addf %41, %43 : vector<1x128xf32>
      %c0_24 = arith.constant 0 : index
      %c0_25 = arith.constant 0 : index
      %45 = vector.load %arg14[%c0_24, %c0_25] : memref<1x128xf32, #tpu.memory_space<vmem>>, vector<1x128xf32>
      tpu.vector_store %arg14[%c0_24, %c0_25], %44 {strides = array<i32>} : memref<1x128xf32, #tpu.memory_space<vmem>>, vector<1x128xf32>,
      %c0_26 = arith.constant 0 : index
      %c0_27 = arith.constant 0 : index
      %46 = vector.load %arg15[%c0_26, %c0_27] : memref<1x128xf32, #tpu.memory_space<vmem>>, vector<1x128xf32>
      %47 = arith.mulf %40, %36 : vector<128x128xf32>
      %cst_28 = arith.constant dense<0.000000e+00> : vector<128xf32>
      %48 = vector.multi_reduction <add>, %47, %cst_28 [0] : vector<128x128xf32> to vector<128xf32>
      %49 = vector.shape_cast %48 : vector<128xf32> to vector<1x128xf32>
      %50 = arith.addf %46, %49 : vector<1x128xf32>
      %c0_29 = arith.constant 0 : index
      %c0_30 = arith.constant 0 : index
      %51 = vector.load %arg15[%c0_29, %c0_30] : memref<1x128xf32, #tpu.memory_space<vmem>>, vector<1x128xf32>
      tpu.vector_store %arg15[%c0_29, %c0_30], %50 {strides = array<i32>} : memref<1x128xf32, #tpu.memory_space<vmem>>, vector<1x128xf32>,
      %52 = arith.truncf %36 : vector<128x128xf32> to vector<128x128xbf16>
      %53 = arith.index_cast %4 : i32 to index
      %c0_31 = arith.constant 0 : index
      %54 = vector.load %arg13[%53, %c0_31] : memref<128x128xbf16, #tpu.memory_space<vmem>>, vector<128x128xbf16>
      tpu.vector_store %arg13[%53, %c0_31], %52 {strides = array<i32>} : memref<128x128xbf16, #tpu.memory_space<vmem>>, vector<128x128xbf16>,
    } else {
    }
    %c0_i32_9 = arith.constant 0 : i32
    %20 = arith.cmpi eq, %arg1, %c0_i32_9 : i32
    %21 = arith.extui %20 : i1 to i32
    %c0_i32_10 = arith.constant 0 : i32
    %22 = arith.cmpi ne, %21, %c0_i32_10 : i32
    scf.if %22 {
      %c0_11 = arith.constant 0 : index
      %c0_12 = arith.constant 0 : index
      %23 = vector.load %arg14[%c0_11, %c0_12] : memref<1x128xf32, #tpu.memory_space<vmem>>, vector<1x128xf32>
      %cst = arith.constant 1.250000e-01 : f32
      %24 = vector.broadcast %cst : f32 to vector<1x128xf32>
      %25 = arith.mulf %23, %24 : vector<1x128xf32>
      %c0_13 = arith.constant 0 : index
      %c0_14 = arith.constant 0 : index
      %26 = vector.load %arg15[%c0_13, %c0_14] : memref<1x128xf32, #tpu.memory_space<vmem>>, vector<1x128xf32>
      %cst_15 = arith.constant 1.250000e-01 : f32
      %27 = vector.broadcast %cst_15 : f32 to vector<1x128xf32>
      %28 = arith.mulf %26, %27 : vector<1x128xf32>
      %29 = arith.mulf %25, %25 : vector<1x128xf32>
      %30 = arith.subf %28, %29 : vector<1x128xf32>
      %cst_16 = arith.constant 0.000000e+00 : f32
      %31 = vector.broadcast %cst_16 : f32 to vector<1x128xf32>
      %32 = arith.maximumf %30, %31 : vector<1x128xf32>
      %cst_17 = arith.constant 9.99999974E-6 : f32
      %33 = vector.broadcast %cst_17 : f32 to vector<1x128xf32>
      %34 = arith.addf %32, %33 : vector<1x128xf32>
      %35 = math.rsqrt %34 : vector<1x128xf32>
      %c0_18 = arith.constant 0 : index
      %c0_19 = arith.constant 0 : index
      %c0_20 = arith.constant 0 : index
      %36 = vector.load %arg7[%c0_18, %c0_19, %c0_20] : memref<1x1x128xf32, #tpu.memory_space<vmem>>, vector<1x1x128xf32>
      %37 = vector.shape_cast %36 : vector<1x1x128xf32> to vector<1x128xf32>
      %38 = arith.mulf %35, %37 : vector<1x128xf32>
      %c0_21 = arith.constant 0 : index
      %c0_22 = arith.constant 0 : index
      %c0_23 = arith.constant 0 : index
      %39 = vector.load %arg8[%c0_21, %c0_22, %c0_23] : memref<1x1x128xf32, #tpu.memory_space<vmem>>, vector<1x1x128xf32>
      %40 = vector.shape_cast %39 : vector<1x1x128xf32> to vector<1x128xf32>
      %41 = arith.mulf %25, %38 : vector<1x128xf32>
      %42 = arith.subf %40, %41 : vector<1x128xf32>
      %c0_24 = arith.constant 0 : index
      %c0_25 = arith.constant 0 : index
      %43 = vector.load %arg13[%c0_24, %c0_25] : memref<128x128xbf16, #tpu.memory_space<vmem>>, vector<128x128xbf16>
      %44 = arith.extf %43 : vector<128x128xbf16> to vector<128x128xf32>
      %45 = vector.broadcast %38 : vector<1x128xf32> to vector<128x128xf32>
      %46 = arith.mulf %44, %45 : vector<128x128xf32>
      %47 = vector.broadcast %42 : vector<1x128xf32> to vector<128x128xf32>
      %48 = arith.addf %46, %47 : vector<128x128xf32>
      %cst_26 = arith.constant 0.000000e+00 : f32
      %49 = vector.broadcast %cst_26 : f32 to vector<128x128xf32>
      %50 = arith.maximumf %48, %49 : vector<128x128xf32>
      %51 = arith.truncf %50 : vector<128x128xf32> to vector<128x128xbf16>
      %c0_27 = arith.constant 0 : index
      %c0_28 = arith.constant 0 : index
      %52 = vector.load %arg12[%c0_27, %c0_28] : memref<128x128xbf16, #tpu.memory_space<vmem>>, vector<128x128xbf16>
      tpu.vector_store %arg12[%c0_27, %c0_28], %51 {strides = array<i32>} : memref<128x128xbf16, #tpu.memory_space<vmem>>, vector<128x128xbf16>,
      %c5_i32 = arith.constant 5 : i32
      %53 = arith.cmpi eq, %arg0, %c5_i32 : i32
      %54 = arith.extui %53 : i1 to i32
      %c0_i32_29 = arith.constant 0 : i32
      %55 = arith.cmpi ne, %54, %c0_i32_29 : i32
      scf.if %55 {
        %c0_30 = arith.constant 0 : index
        %c0_31 = arith.constant 0 : index
        %56 = vector.load %arg4[%c0_30, %c0_31] : memref<8x128xbf16, #tpu.memory_space<vmem>>, vector<8x128xbf16>
        %57 = arith.truncf %50 : vector<128x128xf32> to vector<128x128xbf16>
        %cst_32 = arith.constant dense<0.000000e+00> : vector<8x128xf32>
        %58 = tpu.matmul %56, %57, %cst_32 {dimension_numbers = #tpu.dot_dimension_numbers<[1], [0], [0], [1], [0, 0, 1, 1], [], []>} : vector<8x128xbf16>, vector<128x128xbf16>, vector<8x128xf32> -> vector<8x128xf32>
        %c0_33 = arith.constant 0 : index
        %c0_34 = arith.constant 0 : index
        %59 = vector.load %arg9[%c0_33, %c0_34] : memref<128x128xf32, #tpu.memory_space<vmem>>, vector<128x128xf32>
        %cst_35 = arith.constant dense<0.000000e+00> : vector<8x128xf32>
        %60 = tpu.matmul %58, %59, %cst_35 {dimension_numbers = #tpu.dot_dimension_numbers<[1], [0], [0], [1], [0, 0, 1, 1], [], []>} : vector<8x128xf32>, vector<128x128xf32>, vector<8x128xf32> -> vector<8x128xf32>
        %c0_36 = arith.constant 0 : index
        %c0_37 = arith.constant 0 : index
        %61 = vector.load %arg10[%c0_36, %c0_37] : memref<1x128xf32, #tpu.memory_space<vmem>>, vector<1x128xf32>
        %62 = vector.broadcast %61 : vector<1x128xf32> to vector<8x128xf32>
        %63 = arith.addf %60, %62 : vector<8x128xf32>
        %c0_38 = arith.constant 0 : index
        %c0_39 = arith.constant 0 : index
        %64 = vector.load %arg11[%c0_38, %c0_39] : memref<8x128xf32, #tpu.memory_space<vmem>>, vector<8x128xf32>
        tpu.vector_store %arg11[%c0_38, %c0_39], %63 {strides = array<i32>} : memref<8x128xf32, #tpu.memory_space<vmem>>, vector<8x128xf32>,
      } else {
      }
    } else {
    }
    return
  }
  func.func @transform_0(%arg0: i32, %arg1: i32) -> (i32, i32) {
    %c0_i32 = arith.constant 0 : i32
    %c0_i32_0 = arith.constant 0 : i32
    %c0_i32_1 = arith.constant 0 : i32
    return %c0_i32, %c0_i32_0 : i32, i32
  }
  func.func @transform_1(%arg0: i32, %arg1: i32) -> (i32, i32) {
    %c0_i32 = arith.constant 0 : i32
    %c0_i32_0 = arith.constant 0 : i32
    %c0_i32_1 = arith.constant 0 : i32
    return %c0_i32, %c0_i32_0 : i32, i32
  }
  func.func @transform_2(%arg0: i32, %arg1: i32) -> (i32, i32) {
    %c0_i32 = arith.constant 0 : i32
    %c0_i32_0 = arith.constant 0 : i32
    %c0_i32_1 = arith.constant 0 : i32
    return %c0_i32, %c0_i32_0 : i32, i32
  }
  func.func @transform_3(%arg0: i32, %arg1: i32) -> (i32, i32, i32) {
    %c0_i32 = arith.constant 0 : i32
    %c0_i32_0 = arith.constant 0 : i32
    %c0_i32_1 = arith.constant 0 : i32
    return %arg0, %c0_i32, %c0_i32_0 : i32, i32, i32
  }
  func.func @transform_4(%arg0: i32, %arg1: i32) -> (i32, i32, i32) {
    %c0_i32 = arith.constant 0 : i32
    %c0_i32_0 = arith.constant 0 : i32
    %c0_i32_1 = arith.constant 0 : i32
    return %arg0, %c0_i32, %c0_i32_0 : i32, i32, i32
  }
  func.func @transform_5(%arg0: i32, %arg1: i32) -> (i32, i32, i32) {
    %c0_i32 = arith.constant 0 : i32
    %c0_i32_0 = arith.constant 0 : i32
    %c0_i32_1 = arith.constant 0 : i32
    return %arg0, %c0_i32, %c0_i32_0 : i32, i32, i32
  }
  func.func @transform_6(%arg0: i32, %arg1: i32) -> (i32, i32, i32) {
    %c0_i32 = arith.constant 0 : i32
    %c0_i32_0 = arith.constant 0 : i32
    %c0_i32_1 = arith.constant 0 : i32
    return %arg0, %c0_i32, %c0_i32_0 : i32, i32, i32
  }
  func.func @transform_7(%arg0: i32, %arg1: i32) -> (i32, i32) {
    %c0_i32 = arith.constant 0 : i32
    %c0_i32_0 = arith.constant 0 : i32
    %c0_i32_1 = arith.constant 0 : i32
    return %c0_i32, %c0_i32_0 : i32, i32
  }
  func.func @transform_8(%arg0: i32, %arg1: i32) -> (i32, i32) {
    %c0_i32 = arith.constant 0 : i32
    %c0_i32_0 = arith.constant 0 : i32
    %c0_i32_1 = arith.constant 0 : i32
    return %c0_i32, %c0_i32_0 : i32, i32
  }
  func.func @transform_9(%arg0: i32, %arg1: i32) -> (i32, i32) {
    %c0_i32 = arith.constant 0 : i32
    %c0_i32_0 = arith.constant 0 : i32
    %c0_i32_1 = arith.constant 0 : i32
    return %c0_i32, %c0_i32_0 : i32, i32
  }
}

</mosaic_0001>

<llo_original>
// kernel: gnn_forward.1
$region0: #{gnn_forward.1}
  #allocation0 [shape = 'u32[]', space=smem, size = 0x4, offset = 0x4, fixed_abs, tag = 'smem constant byte address 0x4 - core index']
  #allocation1 [shape = 'u32[144,128]{1,0:T(1,128)}', space=vmem, size = 0x12000, scoped, tag = 'internal scratch']
  #allocation2 [shape = 'bf16[128,128]{1,0:T(16,128)(2,1)}', space=vmem, size = 0x8000, scoped, tag = 'scratch operand']
  #allocation3 [shape = 'bf16[128,128]{1,0:T(16,128)(2,1)}', space=vmem, size = 0x8000, scoped, tag = 'scratch operand']
  #allocation4 [shape = 'f32[1,128]{1,0:T(1,128)}', space=vmem, size = 0x200, scoped, tag = 'scratch operand']
  #allocation5 [shape = 'f32[1,128]{1,0:T(1,128)}', space=vmem, size = 0x200, scoped, tag = 'scratch operand']
  %s0 = inlined_call_operand.hbm [shape: bf16[128,128], index: 0, kind: input, shape index: {}]
  %s1 = inlined_call_operand.hbm [shape: bf16[128,128], index: 1, kind: input, shape index: {}]
  %s2 = inlined_call_operand.hbm [shape: bf16[8,128], index: 2, kind: input, shape index: {}]
  %s3 = inlined_call_operand.hbm [shape: bf16[6,256,128], index: 3, kind: input, shape index: {}]
  %s4 = inlined_call_operand.vmem [shape: f32[6,1,128], index: 4, kind: input, shape index: {}]
  %s5 = inlined_call_operand.vmem [shape: f32[6,1,128], index: 5, kind: input, shape index: {}]
  %s6 = inlined_call_operand.hbm [shape: f32[6,1,128], index: 6, kind: input, shape index: {}]
  %s7 = inlined_call_operand.hbm [shape: f32[128,128], index: 7, kind: input, shape index: {}]
  %s8 = inlined_call_operand.vmem [shape: f32[1,128], index: 8, kind: input, shape index: {}]
  %s9 = inlined_call_operand.vmem [shape: f32[8,128], index: 9, kind: output, shape index: {}]
  %s10 = sld [smem:[#allocation0]]
  $region113: #{gnn_forward.1} parent=0
    _
  %s12 = ssub.s32 1, %s10
  %s13 = scalar_select 0, %s12, %s10
  $region1: #{gnn_forward.1} parent=0
    #allocation6 [shape = 'u8[32768]{0}', space=vmem, size = 0x8000, scoped, tag = 'input window, operand 0, single buffered']
    #allocation7 [shape = 's32[2]{0}', space=sflag, size = 0x8, scoped, tag = 'scoped memory for gnn_forward.1']
    #allocation8 [shape = 'u8[32768]{0}', space=vmem, size = 0x8000, scoped, tag = 'input window, operand 1, single buffered']
    #allocation9 [shape = 's32[1]{0}', space=sflag, size = 0x4, scoped, tag = 'scoped memory for gnn_forward.1']
    #allocation10 [shape = 'u8[2048]{0}', space=vmem, size = 0x800, scoped, tag = 'input window, operand 2, single buffered']
    #allocation11 [shape = 'u8[131072]{0}', space=vmem, size = 0x20000, scoped, tag = 'input window, operand 3']
    #allocation12 [shape = 's32[2]{0}', space=sflag, size = 0x8, scoped, tag = 'scoped memory for gnn_forward.1']
    #allocation13 [shape = 'u8[1024]{0}', space=vmem, size = 0x400, scoped, tag = 'input window, operand 6']
    #allocation14 [shape = 'u8[65536]{0}', space=vmem, size = 0x10000, scoped, tag = 'input window, operand 7, single buffered']
    #allocation15 [shape = 's32[1]{0}', space=sflag, size = 0x4, scoped, tag = 'scoped memory for gnn_forward.1']
    %14 = vsyncpa [#allocation7], 0
    %15 = vsyncpa [#allocation9], 0
    %16 = vsyncpa [#allocation12], 0
    %s17 = scalar_lea.sflag [#allocation12], 1
    %18 = vsyncpa %s17, 0
    %19 = vsyncpa [#allocation15], 0
    loop: start=0, step=1, limit=8
    $region2: #{gnn_forward.1} parent=1 // loop_pre_header
      _
    $region3: #{gnn_forward.1} parent=1 // loop_header
      %s21 = sphi 0, %s25
      %p22 = scmp.ge.s32.totalorder %s21, 8
      %s28 = sphi 0, %s40
      %s29 = sphi 0, %s36
      %s30 = sphi 0, %s28
      %s31 = sphi 0, %s29
      %s32 = sphi 0, %s30
      %s33 = sphi 0, %s31
      %s41 = sphi 0, %s41
      %s43 = sphi 0, %s41
      %s44 = sphi 0, %s43
      %s58 = sphi 0, %s44
      %s62 = sphi 0, %s62
      %s64 = sphi 0, %s62
      %s65 = sphi 0, %s64
      %s79 = sphi 0, %s65
      %s83 = sphi 0, %s83
      %s85 = sphi 0, %s83
      %s86 = sphi 0, %s85
      %s100 = sphi 0, %s86
      %s106 = sphi 0, %s108
      %s109 = sphi 0, %s106
      %s110 = sphi 0, %s109
      %s126 = sphi 0, %s110
      %s132 = sphi 0, %s134
      %s135 = sphi 0, %s132
      %s136 = sphi 0, %s135
      %s152 = sphi 0, %s136
      %s158 = sphi 0, %s160
      %s161 = sphi 0, %s158
      %s162 = sphi 0, %s161
      %s178 = sphi 0, %s162
      %s184 = sphi 0, %s186
      %s187 = sphi 0, %s184
      %s188 = sphi 0, %s187
      %s204 = sphi 0, %s188
      %s208 = sphi 0, %s208
      %s210 = sphi 0, %s208
      %s211 = sphi 0, %s210
      %s225 = sphi 0, %s211
      %s229 = sphi 0, %s229
      %s231 = sphi 0, %s229
      %s232 = sphi 0, %s231
      %s246 = sphi 0, %s232
      %s250 = sphi 0, %s250
      %s252 = sphi 0, %s250
      %s253 = sphi 0, %s252
      %s267 = sphi 0, %s253
    $region4: #{gnn_forward.1} parent=1 // loop_header_branch
      %24 = sbr.rel (%p22) target = $region8
    $region5: #{gnn_forward.1} parent=1 // loop_body
      %s26 = ssub.s32 %s21, 1
      %s27 = ssub.s32 %s21, 2
      %s34 = sadd.s32 1, %s29
      %p35 = scmp.ge.s32.totalorder %s34, 1
      %s36 = scalar_select %p35, 0, %s34
      %s37 = sadd.s32 1, %s28
      %s38 = scalar_select %p35, %s37, %s28
      %p39 = scmp.ge.s32.totalorder %s38, 6
      %s40 = scalar_select %p39, 0, %s38
      %s42 = sadd.s32 %s41, 1
      %p45 = scmp.eq.s32.totalorder %s21, 5
      %p46 = scmp.ne.s32.totalorder %s41, %s43
      %p47 = scmp.eq.s32.totalorder %s21, 0
      %p48 = por %p46, %p47
      %p49 = scmp.ne.s32.totalorder %s41, %s43
      %p50 = scmp.eq.s32.totalorder %s26, 5
      %p51 = por %p49, %p50
      %p52 = scmp.ne.s32.totalorder %s43, %s44
      %p53 = scmp.eq.s32.totalorder %s26, 0
      %p54 = por %p52, %p53
      %p55 = scmp.ne.s32.totalorder %s43, %s44
      %p56 = scmp.eq.s32.totalorder %s27, 5
      %p57 = por %p55, %p56
      %p59 = scmp.ne.s32.totalorder %s44, %s58
      %p60 = scmp.eq.s32.totalorder %s27, 0
      %p61 = por %p59, %p60
      %s63 = sadd.s32 %s62, 1
      %p66 = scmp.eq.s32.totalorder %s21, 5
      %p67 = scmp.ne.s32.totalorder %s62, %s64
      %p68 = scmp.eq.s32.totalorder %s21, 0
      %p69 = por %p67, %p68
      %p70 = scmp.ne.s32.totalorder %s62, %s64
      %p71 = scmp.eq.s32.totalorder %s26, 5
      %p72 = por %p70, %p71
      %p73 = scmp.ne.s32.totalorder %s64, %s65
      %p74 = scmp.eq.s32.totalorder %s26, 0
      %p75 = por %p73, %p74
      %p76 = scmp.ne.s32.totalorder %s64, %s65
      %p77 = scmp.eq.s32.totalorder %s27, 5
      %p78 = por %p76, %p77
      %p80 = scmp.ne.s32.totalorder %s65, %s79
      %p81 = scmp.eq.s32.totalorder %s27, 0
      %p82 = por %p80, %p81
      %s84 = sadd.s32 %s83, 1
      %p87 = scmp.eq.s32.totalorder %s21, 5
      %p88 = scmp.ne.s32.totalorder %s83, %s85
      %p89 = scmp.eq.s32.totalorder %s21, 0
      %p90 = por %p88, %p89
      %p91 = scmp.ne.s32.totalorder %s83, %s85
      %p92 = scmp.eq.s32.totalorder %s26, 5
      %p93 = por %p91, %p92
      %p94 = scmp.ne.s32.totalorder %s85, %s86
      %p95 = scmp.eq.s32.totalorder %s26, 0
      %p96 = por %p94, %p95
      %p97 = scmp.ne.s32.totalorder %s85, %s86
      %p98 = scmp.eq.s32.totalorder %s27, 5
      %p99 = por %p97, %p98
      %p101 = scmp.ne.s32.totalorder %s86, %s100
      %p102 = scmp.eq.s32.totalorder %s27, 0
      %p103 = por %p101, %p102
      %s104 = ssub.s32 %s28, %s40
      %p105 = scmp.eq.s32.totalorder %s104, 0
      %s107 = sadd.s32 %s106, 1
      %s108 = scalar_select %p105, %s106, %s107
      %p111 = pneg %p105
      %p112 = scmp.eq.s32.totalorder %s21, 5
      %p113 = por %p111, %p112
      %p114 = scmp.ne.s32.totalorder %s106, %s109
      %p115 = scmp.eq.s32.totalorder %s21, 0
      %p116 = por %p114, %p115
      %p117 = scmp.ne.s32.totalorder %s106, %s109
      %p118 = scmp.eq.s32.totalorder %s26, 5
      %p119 = por %p117, %p118
      %p120 = scmp.ne.s32.totalorder %s109, %s110
      %p121 = scmp.eq.s32.totalorder %s26, 0
      %p122 = por %p120, %p121
      %p123 = scmp.ne.s32.totalorder %s109, %s110
      %p124 = scmp.eq.s32.totalorder %s27, 5
      %p125 = por %p123, %p124
      %p127 = scmp.ne.s32.totalorder %s110, %s126
      %p128 = scmp.eq.s32.totalorder %s27, 0
      %p129 = por %p127, %p128
      %s130 = ssub.s32 %s28, %s40
      %p131 = scmp.eq.s32.totalorder %s130, 0
      %s133 = sadd.s32 %s132, 1
      %s134 = scalar_select %p131, %s132, %s133
      %p137 = pneg %p131
      %p138 = scmp.eq.s32.totalorder %s21, 5
      %p139 = por %p137, %p138
      %p140 = scmp.ne.s32.totalorder %s132, %s135
      %p141 = scmp.eq.s32.totalorder %s21, 0
      %p142 = por %p140, %p141
      %p143 = scmp.ne.s32.totalorder %s132, %s135
      %p144 = scmp.eq.s32.totalorder %s26, 5
      %p145 = por %p143, %p144
      %p146 = scmp.ne.s32.totalorder %s135, %s136
      %p147 = scmp.eq.s32.totalorder %s26, 0
      %p148 = por %p146, %p147
      %p149 = scmp.ne.s32.totalorder %s135, %s136
      %p150 = scmp.eq.s32.totalorder %s27, 5
      %p151 = por %p149, %p150
      %p153 = scmp.ne.s32.totalorder %s136, %s152
      %p154 = scmp.eq.s32.totalorder %s27, 0
      %p155 = por %p153, %p154
      %s156 = ssub.s32 %s28, %s40
      %p157 = scmp.eq.s32.totalorder %s156, 0
      %s159 = sadd.s32 %s158, 1
      %s160 = scalar_select %p157, %s158, %s159
      %p163 = pneg %p157
      %p164 = scmp.eq.s32.totalorder %s21, 5
      %p165 = por %p163, %p164
      %p166 = scmp.ne.s32.totalorder %s158, %s161
      %p167 = scmp.eq.s32.totalorder %s21, 0
      %p168 = por %p166, %p167
      %p169 = scmp.ne.s32.totalorder %s158, %s161
      %p170 = scmp.eq.s32.totalorder %s26, 5
      %p171 = por %p169, %p170
      %p172 = scmp.ne.s32.totalorder %s161, %s162
      %p173 = scmp.eq.s32.totalorder %s26, 0
      %p174 = por %p172, %p173
      %p175 = scmp.ne.s32.totalorder %s161, %s162
      %p176 = scmp.eq.s32.totalorder %s27, 5
      %p177 = por %p175, %p176
      %p179 = scmp.ne.s32.totalorder %s162, %s178
      %p180 = scmp.eq.s32.totalorder %s27, 0
      %p181 = por %p179, %p180
      %s182 = ssub.s32 %s28, %s40
      %p183 = scmp.eq.s32.totalorder %s182, 0
      %s185 = sadd.s32 %s184, 1
      %s186 = scalar_select %p183, %s184, %s185
      %p189 = pneg %p183
      %p190 = scmp.eq.s32.totalorder %s21, 5
      %p191 = por %p189, %p190
      %p192 = scmp.ne.s32.totalorder %s184, %s187
      %p193 = scmp.eq.s32.totalorder %s21, 0
      %p194 = por %p192, %p193
      %p195 = scmp.ne.s32.totalorder %s184, %s187
      %p196 = scmp.eq.s32.totalorder %s26, 5
      %p197 = por %p195, %p196
      %p198 = scmp.ne.s32.totalorder %s187, %s188
      %p199 = scmp.eq.s32.totalorder %s26, 0
      %p200 = por %p198, %p199
      %p201 = scmp.ne.s32.totalorder %s187, %s188
      %p202 = scmp.eq.s32.totalorder %s27, 5
      %p203 = por %p201, %p202
      %p205 = scmp.ne.s32.totalorder %s188, %s204
      %p206 = scmp.eq.s32.totalorder %s27, 0
      %p207 = por %p205, %p206
      %s209 = sadd.s32 %s208, 1
      %p212 = scmp.eq.s32.totalorder %s21, 5
      %p213 = scmp.ne.s32.totalorder %s208, %s210
      %p214 = scmp.eq.s32.totalorder %s21, 0
      %p215 = por %p213, %p214
      %p216 = scmp.ne.s32.totalorder %s208, %s210
      %p217 = scmp.eq.s32.totalorder %s26, 5
      %p218 = por %p216, %p217
      %p219 = scmp.ne.s32.totalorder %s210, %s211
      %p220 = scmp.eq.s32.totalorder %s26, 0
      %p221 = por %p219, %p220
      %p222 = scmp.ne.s32.totalorder %s210, %s211
      %p223 = scmp.eq.s32.totalorder %s27, 5
      %p224 = por %p222, %p223
      %p226 = scmp.ne.s32.totalorder %s211, %s225
      %p227 = scmp.eq.s32.totalorder %s27, 0
      %p228 = por %p226, %p227
      %s230 = sadd.s32 %s229, 1
      %p233 = scmp.eq.s32.totalorder %s21, 5
      %p234 = scmp.ne.s32.totalorder %s229, %s231
      %p235 = scmp.eq.s32.totalorder %s21, 0
      %p236 = por %p234, %p235
      %p237 = scmp.ne.s32.totalorder %s229, %s231
      %p238 = scmp.eq.s32.totalorder %s26, 5
      %p239 = por %p237, %p238
      %p240 = scmp.ne.s32.totalorder %s231, %s232
      %p241 = scmp.eq.s32.totalorder %s26, 0
      %p242 = por %p240, %p241
      %p243 = scmp.ne.s32.totalorder %s231, %s232
      %p244 = scmp.eq.s32.totalorder %s27, 5
      %p245 = por %p243, %p244
      %p247 = scmp.ne.s32.totalorder %s232, %s246
      %p248 = scmp.eq.s32.totalorder %s27, 0
      %p249 = por %p247, %p248
      %s251 = sadd.s32 %s250, 1
      %p254 = scmp.eq.s32.totalorder %s21, 5
      %p255 = scmp.ne.s32.totalorder %s250, %s252
      %p256 = scmp.eq.s32.totalorder %s21, 0
      %p257 = por %p255, %p256
      %p258 = scmp.ne.s32.totalorder %s250, %s252
      %p259 = scmp.eq.s32.totalorder %s26, 5
      %p260 = por %p258, %p259
      %p261 = scmp.ne.s32.totalorder %s252, %s253
      %p262 = scmp.eq.s32.totalorder %s26, 0
      %p263 = por %p261, %p262
      %p264 = scmp.ne.s32.totalorder %s252, %s253
      %p265 = scmp.eq.s32.totalorder %s27, 5
      %p266 = por %p264, %p265
      %p268 = scmp.ne.s32.totalorder %s253, %s267
      %p269 = scmp.eq.s32.totalorder %s27, 0
      %p270 = por %p268, %p269
      %p271 = scmp.le.s32.totalorder 1, %s21
      %p272 = scmp.lt.s32.totalorder %s21, 7
      %p273 = pnand %p271, %p272
      %p274 = pneg %p273
      // Predicated region
      $region9: #{gnn_forward.1} parent=5 // pred_check
        _
      $region10: #{gnn_forward.1} parent=5 // pred_check_branch
        %276 = sbr.rel (%p273) target = $region12
      $region11: #{gnn_forward.1} parent=5 // pred_region
        %s277 = ssub.s32 %s21, 1
        // Predicated region
        $region13: #{gnn_forward.1} parent=11 // pred_check
          %p278 = pneg %p54
        $region14: #{gnn_forward.1} parent=11 // pred_check_branch
          %280 = sbr.rel (%p278) target = $region16
        $region15: #{gnn_forward.1} parent=11 // pred_region
          %s282 = ssub.s32 1024, 1024
          %283 = vsyncadd [#allocation7], %s282
          %s284 = sshll.u32 [#allocation6], 4
          %s285 = int_to_ptr.vmem [resolvable:$true] %s284
          %290 = dma.hbm_to_vmem [thread:$0]  %s0, 1024, %s285, [#allocation7], 64, 64, 4
        $region16: #{gnn_forward.1} parent=11 // pred_fallthru
          _
        // Predicated region
        $region17: #{gnn_forward.1} parent=11 // pred_check
          %p291 = pneg %p75
        $region18: #{gnn_forward.1} parent=11 // pred_check_branch
          %293 = sbr.rel (%p291) target = $region20
        $region19: #{gnn_forward.1} parent=11 // pred_region
          %s295 = ssub.s32 1024, 1024
          %296 = vsyncadd [#allocation9], %s295
          %s297 = sshll.u32 [#allocation8], 4
          %s298 = int_to_ptr.vmem [resolvable:$true] %s297
          %303 = dma.hbm_to_vmem [thread:$0]  %s1, 1024, %s298, [#allocation9], 64, 64, 4
        $region20: #{gnn_forward.1} parent=11 // pred_fallthru
          _
        // Predicated region
        $region21: #{gnn_forward.1} parent=11 // pred_check
          %p304 = pneg %p96
        $region22: #{gnn_forward.1} parent=11 // pred_check_branch
          %306 = sbr.rel (%p304) target = $region24
        $region23: #{gnn_forward.1} parent=11 // pred_region
          %s308 = ssub.s32 64, 64
          %309 = vsyncadd [#allocation9], %s308
          %s311 = sshll.u32 [#allocation10], 4
          %s312 = int_to_ptr.vmem [resolvable:$true] %s311
          %314 = dma.hbm_to_vmem [thread:$0]  %s2, 64, %s312, [#allocation9]
        $region24: #{gnn_forward.1} parent=11 // pred_fallthru
          _
        // Predicated region
        $region25: #{gnn_forward.1} parent=11 // pred_check
          %p315 = pneg %p221
        $region26: #{gnn_forward.1} parent=11 // pred_check_branch
          %317 = sbr.rel (%p315) target = $region28
        $region27: #{gnn_forward.1} parent=11 // pred_region
          %s319 = ssub.s32 2048, 2048
          %320 = vsyncadd [#allocation15], %s319
          %s321 = sshll.u32 [#allocation14], 4
          %s322 = int_to_ptr.vmem [resolvable:$true] %s321
          %327 = dma.hbm_to_vmem [thread:$0]  %s7, 2048, %s322, [#allocation15], 128, 128, 8
        $region28: #{gnn_forward.1} parent=11 // pred_fallthru
          _
        // Predicated region
        $region29: #{gnn_forward.1} parent=11 // pred_check
          %p328 = pneg %p242
        $region30: #{gnn_forward.1} parent=11 // pred_check_branch
          %330 = sbr.rel (%p328) target = $region32
        $region31: #{gnn_forward.1} parent=11 // pred_region
          _
        $region32: #{gnn_forward.1} parent=11 // pred_fallthru
          _
      $region12: #{gnn_forward.1} parent=5 // pred_fallthru
        _
      %p331 = scmp.lt.s32.totalorder %s21, 6
      // Predicated region
      $region33: #{gnn_forward.1} parent=5 // pred_check
        %p332 = pneg %p331
      $region34: #{gnn_forward.1} parent=5 // pred_check_branch
        %334 = sbr.rel (%p332) target = $region36
      $region35: #{gnn_forward.1} parent=5 // pred_region
        // Predicated region
        $region37: #{gnn_forward.1} parent=35 // pred_check
          %p335 = pneg %p116
        $region38: #{gnn_forward.1} parent=35 // pred_check_branch
          %337 = sbr.rel (%p335) target = $region40
        $region39: #{gnn_forward.1} parent=35 // pred_region
          %s338 = sand.u32 %s21, 1
          %s339 = scalar_lea.sflag [#allocation12], %s338
          %s340 = sand.u32 %s106, 1
          %s341 = smul.addr %s340, 128
          %s342 = scalar_lea.vmem [#allocation11], %s341
          %s344 = ssub.s32 2048, 2048
          %345 = vsyncadd %s339, %s344
          %s346 = smul.addr %s28, 32
          %s347 = smul.addr %s346, 64
          %s348 = scalar_lea.hbm %s3, %s347
          %s349 = sshll.u32 %s342, 4
          %s350 = int_to_ptr.vmem [resolvable:$true] %s349
          %355 = dma.hbm_to_vmem [thread:$0]  %s348, 2048, %s350, %s339, 64, 64, 4
        $region40: #{gnn_forward.1} parent=35 // pred_fallthru
          _
        // Predicated region
        $region41: #{gnn_forward.1} parent=35 // pred_check
          %p356 = pneg %p142
        $region42: #{gnn_forward.1} parent=35 // pred_check_branch
          %358 = sbr.rel (%p356) target = $region44
        $region43: #{gnn_forward.1} parent=35 // pred_region
          %p359 = scmp.lt.s32.totalorder %s28, 5
          %s360 = scalar_select %p359, %s28, 5
          %s361 = scalar_lea.vmem %s4, %s360
        $region44: #{gnn_forward.1} parent=35 // pred_fallthru
          _
        // Predicated region
        $region45: #{gnn_forward.1} parent=35 // pred_check
          %p362 = pneg %p168
        $region46: #{gnn_forward.1} parent=35 // pred_check_branch
          %364 = sbr.rel (%p362) target = $region48
        $region47: #{gnn_forward.1} parent=35 // pred_region
          %p365 = scmp.lt.s32.totalorder %s28, 5
          %s366 = scalar_select %p365, %s28, 5
          %s367 = scalar_lea.vmem %s5, %s366
        $region48: #{gnn_forward.1} parent=35 // pred_fallthru
          _
        // Predicated region
        $region49: #{gnn_forward.1} parent=35 // pred_check
          %p368 = pneg %p194
        $region50: #{gnn_forward.1} parent=35 // pred_check_branch
          %370 = sbr.rel (%p368) target = $region52
        $region51: #{gnn_forward.1} parent=35 // pred_region
          %s371 = sand.u32 %s21, 1
          %s372 = scalar_lea.sflag [#allocation12], %s371
          %s373 = sand.u32 %s184, 1
          %s374 = scalar_lea.vmem [#allocation13], %s373
          %s376 = ssub.s32 16, 16
          %377 = vsyncadd %s372, %s376
          %s378 = smul.addr %s28, 16
          %s379 = scalar_lea.hbm %s6, %s378
          %s381 = sshll.u32 %s374, 4
          %s382 = int_to_ptr.vmem [resolvable:$true] %s381
          %384 = dma.hbm_to_vmem [thread:$0]  %s379, 16, %s382, %s372
        $region52: #{gnn_forward.1} parent=35 // pred_fallthru
          _
      $region36: #{gnn_forward.1} parent=5 // pred_fallthru
        _
      %p385 = scmp.le.s32.totalorder 1, %s21
      %p386 = scmp.lt.s32.totalorder %s21, 7
      %p387 = pnand %p385, %p386
      %p388 = pneg %p387
      // Predicated region
      $region53: #{gnn_forward.1} parent=5 // pred_check
        _
      $region54: #{gnn_forward.1} parent=5 // pred_check_branch
        %390 = sbr.rel (%p387) target = $region56
      $region55: #{gnn_forward.1} parent=5 // pred_region
        %s391 = ssub.s32 %s21, 1
        // Predicated region
        $region57: #{gnn_forward.1} parent=55 // pred_check
          %p392 = pneg %p54
        $region58: #{gnn_forward.1} parent=55 // pred_check_branch
          %394 = sbr.rel (%p392) target = $region60
        $region59: #{gnn_forward.1} parent=55 // pred_region
          %395 = dma.done [#allocation7], 1024
        $region60: #{gnn_forward.1} parent=55 // pred_fallthru
          _
        // Predicated region
        $region61: #{gnn_forward.1} parent=55 // pred_check
          %p396 = pneg %p75
        $region62: #{gnn_forward.1} parent=55 // pred_check_branch
          %398 = sbr.rel (%p396) target = $region64
        $region63: #{gnn_forward.1} parent=55 // pred_region
          %399 = dma.done [#allocation9], 1024
        $region64: #{gnn_forward.1} parent=55 // pred_fallthru
          _
        // Predicated region
        $region65: #{gnn_forward.1} parent=55 // pred_check
          %p400 = pneg %p96
        $region66: #{gnn_forward.1} parent=55 // pred_check_branch
          %402 = sbr.rel (%p400) target = $region68
        $region67: #{gnn_forward.1} parent=55 // pred_region
          %403 = dma.done [#allocation9], 64
        $region68: #{gnn_forward.1} parent=55 // pred_fallthru
          _
        %s404 = sand.u32 %s26, 1
        %s405 = scalar_lea.sflag [#allocation12], %s404
        %s406 = sand.u32 %s109, 1
        %s407 = smul.addr %s406, 128
        %s408 = scalar_lea.vmem [#allocation11], %s407
        // Predicated region
        $region69: #{gnn_forward.1} parent=55 // pred_check
          %p409 = pneg %p122
        $region70: #{gnn_forward.1} parent=55 // pred_check_branch
          %411 = sbr.rel (%p409) target = $region72
        $region71: #{gnn_forward.1} parent=55 // pred_region
          %412 = dma.done %s405, 2048
        $region72: #{gnn_forward.1} parent=55 // pred_fallthru
          _
        %s413 = sand.u32 %s26, 1
        %s414 = scalar_lea.sflag [#allocation12], %s413
        %s415 = sand.u32 %s187, 1
        %s416 = scalar_lea.vmem [#allocation13], %s415
        // Predicated region
        $region73: #{gnn_forward.1} parent=55 // pred_check
          %p417 = pneg %p200
        $region74: #{gnn_forward.1} parent=55 // pred_check_branch
          %419 = sbr.rel (%p417) target = $region76
        $region75: #{gnn_forward.1} parent=55 // pred_region
          %420 = dma.done %s414, 16
        $region76: #{gnn_forward.1} parent=55 // pred_fallthru
          _
        // Predicated region
        $region77: #{gnn_forward.1} parent=55 // pred_check
          %p421 = pneg %p221
        $region78: #{gnn_forward.1} parent=55 // pred_check_branch
          %423 = sbr.rel (%p421) target = $region80
        $region79: #{gnn_forward.1} parent=55 // pred_region
          %424 = dma.done [#allocation15], 2048
        $region80: #{gnn_forward.1} parent=55 // pred_fallthru
          _
        %p425 = pneg %p54
        %p426 = pneg %p51
        %p427 = pneg %p75
        %p428 = pneg %p72
        %p429 = pneg %p96
        %p430 = pneg %p93
        %s431 = sand.u32 %s26, 1
        %s432 = scalar_lea.sflag [#allocation12], %s431
        %s433 = sand.u32 %s109, 1
        %s434 = smul.addr %s433, 128
        %s435 = scalar_lea.vmem [#allocation11], %s434
        %p436 = pneg %p122
        %p437 = pneg %p119
        %p438 = scmp.lt.s32.totalorder %s30, 5
        %s439 = scalar_select %p438, %s30, 5
        %s440 = scalar_lea.vmem %s4, %s439
        %p441 = pneg %p148
        %p442 = pneg %p145
        %p443 = scmp.lt.s32.totalorder %s30, 5
        %s444 = scalar_select %p443, %s30, 5
        %s445 = scalar_lea.vmem %s5, %s444
        %p446 = pneg %p174
        %p447 = pneg %p171
        %s448 = sand.u32 %s26, 1
        %s449 = scalar_lea.sflag [#allocation12], %s448
        %s450 = sand.u32 %s187, 1
        %s451 = scalar_lea.vmem [#allocation13], %s450
        %p452 = pneg %p200
        %p453 = pneg %p197
        %p454 = pneg %p221
        %p455 = pneg %p218
        %p456 = pneg %p242
        %p457 = pneg %p239
        %p458 = pneg %p263
        %p459 = pneg %p260
        %p460 = scmp.lt.s32.totalorder %s30, 5
        %s461 = scalar_select %p460, %s30, 5
        %s462 = scalar_lea.vmem %s4, %s461
        %p463 = scmp.lt.s32.totalorder %s30, 5
        %s464 = scalar_select %p463, %s30, 5
        %s465 = scalar_lea.vmem %s5, %s464
        %p467 = scmp.eq.s32.totalorder %s31, 0
        // Predicated region
        $region81: #{gnn_forward.1} parent=55 // pred_check
          %p468 = pneg %p467
        $region82: #{gnn_forward.1} parent=55 // pred_check_branch
          %470 = sbr.rel (%p468) target = $region84
        $region83: #{gnn_forward.1} parent=55 // pred_region
          %471 = vst [vmem:[#allocation4] sm:$0x1] 0.0
          %472 = vst [vmem:[#allocation5] sm:$0x1] 0.0
        $region84: #{gnn_forward.1} parent=55 // pred_fallthru
          _
        %s473 = smul.u32 %s31, 128
        %v474 = vlaneseq
        %v475 = vshrl.u32 %v474, 7
        %v476 = vadd.s32 %v475, 8
        %v477 = vadd.s32 %v475, 16
        %v478 = vadd.s32 %v475, 24
        %v479 = vadd.s32 %v475, 32
        %v480 = vadd.s32 %v475, 40
        %v481 = vadd.s32 %v475, 48
        %v482 = vadd.s32 %v475, 56
        %v483 = vadd.s32 %v475, 64
        %v484 = vadd.s32 %v475, 72
        %v485 = vadd.s32 %v475, 80
        %v486 = vadd.s32 %v475, 88
        %v487 = vadd.s32 %v475, 96
        %v488 = vadd.s32 %v475, 104
        %v489 = vadd.s32 %v475, 112
        %v490 = vadd.s32 %v475, 120
        %v491 = vstv %s473
        %v492 = vadd.s32 %v491, %v475
        %v493 = vadd.s32 %v491, %v476
        %v494 = vadd.s32 %v491, %v477
        %v495 = vadd.s32 %v491, %v478
        %v496 = vadd.s32 %v491, %v479
        %v497 = vadd.s32 %v491, %v480
        %v498 = vadd.s32 %v491, %v481
        %v499 = vadd.s32 %v491, %v482
        %v500 = vadd.s32 %v491, %v483
        %v501 = vadd.s32 %v491, %v484
        %v502 = vadd.s32 %v491, %v485
        %v503 = vadd.s32 %v491, %v486
        %v504 = vadd.s32 %v491, %v487
        %v505 = vadd.s32 %v491, %v488
        %v506 = vadd.s32 %v491, %v489
        %v507 = vadd.s32 %v491, %v490
        %vm508 = vcmp.lt.s32.totalorder %v492, 8
        %vm509 = vcmp.lt.s32.totalorder %v493, 8
        %vm510 = vcmp.lt.s32.totalorder %v494, 8
        %vm511 = vcmp.lt.s32.totalorder %v495, 8
        %vm512 = vcmp.lt.s32.totalorder %v496, 8
        %vm513 = vcmp.lt.s32.totalorder %v497, 8
        %vm514 = vcmp.lt.s32.totalorder %v498, 8
        %vm515 = vcmp.lt.s32.totalorder %v499, 8
        %vm516 = vcmp.lt.s32.totalorder %v500, 8
        %vm517 = vcmp.lt.s32.totalorder %v501, 8
        %vm518 = vcmp.lt.s32.totalorder %v502, 8
        %vm519 = vcmp.lt.s32.totalorder %v503, 8
        %vm520 = vcmp.lt.s32.totalorder %v504, 8
        %vm521 = vcmp.lt.s32.totalorder %v505, 8
        %vm522 = vcmp.lt.s32.totalorder %v506, 8
        %vm523 = vcmp.lt.s32.totalorder %v507, 8
        %v524 = vld [vmem:[%s408 + $0x40] sm:$0xf]
        %v525 = vld [vmem:[%s408 + $0x44] sm:$0xf]
        %v526 = vld [vmem:[%s408 + $0x48] sm:$0xf]
        %v527 = vld [vmem:[%s408 + $0x4c] sm:$0xf]
        %v528 = vld [vmem:[%s408 + $0x50] sm:$0xf]
        %v529 = vld [vmem:[%s408 + $0x54] sm:$0xf]
        %v530 = vld [vmem:[%s408 + $0x58] sm:$0xf]
        %v531 = vld [vmem:[%s408 + $0x5c] sm:$0xf]
        %v532 = vld [vmem:[%s408 + $0x60] sm:$0xf]
        %v533 = vld [vmem:[%s408 + $0x64] sm:$0xf]
        %v534 = vld [vmem:[%s408 + $0x68] sm:$0xf]
        %v535 = vld [vmem:[%s408 + $0x6c] sm:$0xf]
        %v536 = vld [vmem:[%s408 + $0x70] sm:$0xf]
        %v537 = vld [vmem:[%s408 + $0x74] sm:$0xf]
        %v538 = vld [vmem:[%s408 + $0x78] sm:$0xf]
        %v539 = vld [vmem:[%s408 + $0x7c] sm:$0xf]
        %v540 = vld [vmem:[%s462] sm:$0x1]
        %p541 = scmp.eq.s32.totalorder %s30, 0
        // Predicated region
        $region85: #{gnn_forward.1} parent=55 // pred_check
          %p542 = pneg %p541
        $region86: #{gnn_forward.1} parent=55 // pred_check_branch
          %544 = sbr.rel (%p542) target = $region88
        $region87: #{gnn_forward.1} parent=55 // pred_region
          %s545 = sshra.s32 %s473, 3
          %s546 = sand.u32 %s473, 7
          %s547 = smul.addr %s545, 4
          %s548 = scalar_lea.vmem [#allocation6], %s547
          %v549 = vld [vmem:[%s548] sm:$0xf]
          %v550 = vld [vmem:[%s548 + $0x4] sm:$0xf]
          %v551 = vld [vmem:[%s548 + $0x8] sm:$0xf]
          %v552 = vld [vmem:[%s548 + $0xc] sm:$0xf]
          %v553 = vld [vmem:[%s548 + $0x10] sm:$0xf]
          %v554 = vld [vmem:[%s548 + $0x14] sm:$0xf]
          %v555 = vld [vmem:[%s548 + $0x18] sm:$0xf]
          %v556 = vld [vmem:[%s548 + $0x1c] sm:$0xf]
          %v557 = vld [vmem:[%s548 + $0x20] sm:$0xf]
          %v558 = vld [vmem:[%s548 + $0x24] sm:$0xf]
          %v559 = vld [vmem:[%s548 + $0x28] sm:$0xf]
          %v560 = vld [vmem:[%s548 + $0x2c] sm:$0xf]
          %v561 = vld [vmem:[%s548 + $0x30] sm:$0xf]
          %v562 = vld [vmem:[%s548 + $0x34] sm:$0xf]
          %v563 = vld [vmem:[%s548 + $0x38] sm:$0xf]
          %v564 = vld [vmem:[%s548 + $0x3c] sm:$0xf]
          %v566 = vlaneseq
          %v567 = vshrl.u32 %v566, 7
          %v568 = vsub.s32 0, %v567
          %v569 = vrot.slane %v540, %v568
          %v587 = vunpack.c.l.b16 %v549
          %v588 = vunpack.c.l.b16 %v550
          %v589 = vunpack.c.l.b16 %v551
          %v590 = vunpack.c.l.b16 %v552
          %v591 = vunpack.c.l.b16 %v553
          %v592 = vunpack.c.l.b16 %v554
          %v593 = vunpack.c.l.b16 %v555
          %v594 = vunpack.c.l.b16 %v556
          %v595 = vunpack.c.l.b16 %v557
          %v596 = vunpack.c.l.b16 %v558
          %v597 = vunpack.c.l.b16 %v559
          %v598 = vunpack.c.l.b16 %v560
          %v599 = vunpack.c.l.b16 %v561
          %v600 = vunpack.c.l.b16 %v562
          %v601 = vunpack.c.l.b16 %v563
          %v602 = vunpack.c.l.b16 %v564
          %v603 = vpack.c.b16 %v588, %v587
          %v604 = vpack.c.b16 %v590, %v589
          %v605 = vpack.c.b16 %v592, %v591
          %v606 = vpack.c.b16 %v594, %v593
          %v607 = vpack.c.b16 %v596, %v595
          %v608 = vpack.c.b16 %v598, %v597
          %v609 = vpack.c.b16 %v600, %v599
          %v610 = vpack.c.b16 %v602, %v601
          %v635 = vunpack.c.l.b16 %v524
          %v636 = vunpack.c.l.b16 %v525
          %v637 = vunpack.c.l.b16 %v526
          %v638 = vunpack.c.l.b16 %v527
          %v639 = vunpack.c.l.b16 %v528
          %v640 = vunpack.c.l.b16 %v529
          %v641 = vunpack.c.l.b16 %v530
          %v642 = vunpack.c.l.b16 %v531
          %v643 = vunpack.c.l.b16 %v532
          %v644 = vunpack.c.l.b16 %v533
          %v645 = vunpack.c.l.b16 %v534
          %v646 = vunpack.c.l.b16 %v535
          %v647 = vunpack.c.l.b16 %v536
          %v648 = vunpack.c.l.b16 %v537
          %v649 = vunpack.c.l.b16 %v538
          %v650 = vunpack.c.l.b16 %v539
          %v651 = vpack.c.b16 %v636, %v635
          %v652 = vpack.c.b16 %v638, %v637
          %v653 = vpack.c.b16 %v640, %v639
          %v654 = vpack.c.b16 %v642, %v641
          %v655 = vpack.c.b16 %v644, %v643
          %v656 = vpack.c.b16 %v646, %v645
          %v657 = vpack.c.b16 %v648, %v647
          %v658 = vpack.c.b16 %v650, %v649
          %667 = vmatprep.subr.bf16.mxu0 0
          %668 = vmatpush1.bf16.msra.mxu0 %v651
          %669 = vmatprep.subr.bf16.mxu0 0
          %670 = vmatpush1.bf16.msra.mxu0 %v652
          %671 = vmatprep.subr.bf16.mxu0 0
          %672 = vmatpush1.bf16.msra.mxu0 %v653
          %673 = vmatprep.subr.bf16.mxu0 0
          %674 = vmatpush1.bf16.msra.mxu0 %v654
          %675 = vmatprep.subr.bf16.mxu0 0
          %676 = vmatpush1.bf16.msra.mxu0 %v655
          %677 = vmatprep.subr.bf16.mxu0 0
          %678 = vmatpush1.bf16.msra.mxu0 %v656
          %679 = vmatprep.subr.bf16.mxu0 0
          %680 = vmatpush1.bf16.msra.mxu0 %v657
          %681 = vmatprep.subr.bf16.mxu0 0
          %682 = vmatpush1.bf16.msra.mxu0 %v658
          %683 = vmatprep.subr.bf16.mxu0 0
          %684 = vmatpush1.bf16.msra.mxu0 0
          %685 = vmatprep.subr.bf16.mxu0 0
          %686 = vmatpush1.bf16.msra.mxu0 0
          %687 = vmatprep.subr.bf16.mxu0 0
          %688 = vmatpush1.bf16.msra.mxu0 0
          %689 = vmatprep.subr.bf16.mxu0 0
          %690 = vmatpush1.bf16.msra.mxu0 0
          %691 = vmatprep.subr.bf16.mxu0 0
          %692 = vmatpush1.bf16.msra.mxu0 0
          %693 = vmatprep.subr.bf16.mxu0 0
          %694 = vmatpush1.bf16.msra.mxu0 0
          %695 = vmatprep.subr.bf16.mxu0 0
          %696 = vmatpush1.bf16.msra.mxu0 0
          %697 = vmatprep.subr.bf16.mxu0 0
          %698 = vmatpush1.bf16.msra.mxu0 0
          %699 = vmatprep.mubr.bf16.mxu0 0
          %700 = vmatmul.mubr.bf16.gmra.mrb[0].mxu0 %v603
          %v701 = vpop.f32.mrb[0].mxu0
          %v702 = vadd.f32 %v569, %v701
          %v703 = vpop.f32.mrb[0].mxu0
          %v704 = vpop.f32.mrb[0].mxu0
          %v705 = vadd.f32 %v569, %v704
          %v706 = vpop.f32.mrb[0].mxu0
          %707 = vmatprep.mubr.bf16.mxu0 0
          %708 = vmatmul.mubr.bf16.gmra.mrb[0].mxu0 %v604
          %v709 = vpop.f32.mrb[0].mxu0
          %v710 = vadd.f32 %v569, %v709
          %v711 = vpop.f32.mrb[0].mxu0
          %v712 = vpop.f32.mrb[0].mxu0
          %v713 = vadd.f32 %v569, %v712
          %v714 = vpop.f32.mrb[0].mxu0
          %715 = vmatprep.mubr.bf16.mxu0 0
          %716 = vmatmul.mubr.bf16.gmra.mrb[0].mxu0 %v605
          %v717 = vpop.f32.mrb[0].mxu0
          %v718 = vadd.f32 %v569, %v717
          %v719 = vpop.f32.mrb[0].mxu0
          %v720 = vpop.f32.mrb[0].mxu0
          %v721 = vadd.f32 %v569, %v720
          %v722 = vpop.f32.mrb[0].mxu0
          %723 = vmatprep.mubr.bf16.mxu0 0
          %724 = vmatmul.mubr.bf16.gmra.mrb[0].mxu0 %v606
          %v725 = vpop.f32.mrb[0].mxu0
          %v726 = vadd.f32 %v569, %v725
          %v727 = vpop.f32.mrb[0].mxu0
          %v728 = vpop.f32.mrb[0].mxu0
          %v729 = vadd.f32 %v569, %v728
          %v730 = vpop.f32.mrb[0].mxu0
          %731 = vmatprep.mubr.bf16.mxu0 0
          %732 = vmatmul.mubr.bf16.gmra.mrb[0].mxu0 %v607
          %v733 = vpop.f32.mrb[0].mxu0
          %v734 = vadd.f32 %v569, %v733
          %v735 = vpop.f32.mrb[0].mxu0
          %v736 = vpop.f32.mrb[0].mxu0
          %v737 = vadd.f32 %v569, %v736
          %v738 = vpop.f32.mrb[0].mxu0
          %739 = vmatprep.mubr.bf16.mxu0 0
          %740 = vmatmul.mubr.bf16.gmra.mrb[0].mxu0 %v608
          %v741 = vpop.f32.mrb[0].mxu0
          %v742 = vadd.f32 %v569, %v741
          %v743 = vpop.f32.mrb[0].mxu0
          %v744 = vpop.f32.mrb[0].mxu0
          %v745 = vadd.f32 %v569, %v744
          %v746 = vpop.f32.mrb[0].mxu0
          %747 = vmatprep.mubr.bf16.mxu0 0
          %748 = vmatmul.mubr.bf16.gmra.mrb[0].mxu0 %v609
          %v749 = vpop.f32.mrb[0].mxu0
          %v750 = vadd.f32 %v569, %v749
          %v751 = vpop.f32.mrb[0].mxu0
          %v752 = vpop.f32.mrb[0].mxu0
          %v753 = vadd.f32 %v569, %v752
          %v754 = vpop.f32.mrb[0].mxu0
          %755 = vmatprep.mubr.bf16.mxu0 0
          %756 = vmatmul.mubr.bf16.gmra.mrb[0].mxu0 %v610
          %v757 = vpop.f32.mrb[0].mxu0
          %v758 = vadd.f32 %v569, %v757
          %v759 = vpop.f32.mrb[0].mxu0
          %v760 = vpop.f32.mrb[0].mxu0
          %v761 = vadd.f32 %v569, %v760
          %v762 = vpop.f32.mrb[0].mxu0
          %763 = vdwg.mxu0
          %v764 = vsel %vm508, 1, 0
          %v765 = vsel %vm509, 1, 0
          %v766 = vsel %vm510, 1, 0
          %v767 = vsel %vm511, 1, 0
          %v768 = vsel %vm512, 1, 0
          %v769 = vsel %vm513, 1, 0
          %v770 = vsel %vm514, 1, 0
          %v771 = vsel %vm515, 1, 0
          %v772 = vsel %vm516, 1, 0
          %v773 = vsel %vm517, 1, 0
          %v774 = vsel %vm518, 1, 0
          %v775 = vsel %vm519, 1, 0
          %v776 = vsel %vm520, 1, 0
          %v777 = vsel %vm521, 1, 0
          %v778 = vsel %vm522, 1, 0
          %v779 = vsel %vm523, 1, 0
          %vm780 = vcmp.eq.s32.totalorder %v764, 1
          %vm781 = vcmp.eq.s32.totalorder %v765, 1
          %vm782 = vcmp.eq.s32.totalorder %v766, 1
          %vm783 = vcmp.eq.s32.totalorder %v767, 1
          %vm784 = vcmp.eq.s32.totalorder %v768, 1
          %vm785 = vcmp.eq.s32.totalorder %v769, 1
          %vm786 = vcmp.eq.s32.totalorder %v770, 1
          %vm787 = vcmp.eq.s32.totalorder %v771, 1
          %vm788 = vcmp.eq.s32.totalorder %v772, 1
          %vm789 = vcmp.eq.s32.totalorder %v773, 1
          %vm790 = vcmp.eq.s32.totalorder %v774, 1
          %vm791 = vcmp.eq.s32.totalorder %v775, 1
          %vm792 = vcmp.eq.s32.totalorder %v776, 1
          %vm793 = vcmp.eq.s32.totalorder %v777, 1
          %vm794 = vcmp.eq.s32.totalorder %v778, 1
          %vm795 = vcmp.eq.s32.totalorder %v779, 1
          %v796 = vsel %vm780, %v702, 0.0
          %v797 = vsel %vm781, %v705, 0.0
          %v798 = vsel %vm782, %v710, 0.0
          %v799 = vsel %vm783, %v713, 0.0
          %v800 = vsel %vm784, %v718, 0.0
          %v801 = vsel %vm785, %v721, 0.0
          %v802 = vsel %vm786, %v726, 0.0
          %v803 = vsel %vm787, %v729, 0.0
          %v804 = vsel %vm788, %v734, 0.0
          %v805 = vsel %vm789, %v737, 0.0
          %v806 = vsel %vm790, %v742, 0.0
          %v807 = vsel %vm791, %v745, 0.0
          %v808 = vsel %vm792, %v750, 0.0
          %v809 = vsel %vm793, %v753, 0.0
          %v810 = vsel %vm794, %v758, 0.0
          %v811 = vsel %vm795, %v761, 0.0
          %v812 = vld [vmem:[#allocation4] sm:$0x1]
          %v813 = vadd.f32 %v796, %v797
          %v814 = vadd.f32 %v813, %v798
          %v815 = vadd.f32 %v814, %v799
          %v816 = vadd.f32 %v815, %v800
          %v817 = vadd.f32 %v816, %v801
          %v818 = vadd.f32 %v817, %v802
          %v819 = vadd.f32 %v818, %v803
          %v820 = vadd.f32 %v819, %v804
          %v821 = vadd.f32 %v820, %v805
          %v822 = vadd.f32 %v821, %v806
          %v823 = vadd.f32 %v822, %v807
          %v824 = vadd.f32 %v823, %v808
          %v825 = vadd.f32 %v824, %v809
          %v826 = vadd.f32 %v825, %v810
          %v827 = vadd.f32 %v826, %v811
          %v828 = vrot.slane %v827, 4
          %v829 = vadd.f32 %v827, %v828
          %v830 = vrot.slane %v829, 2
          %v831 = vadd.f32 %v829, %v830
          %v832 = vrot.slane %v831, 1
          %v833 = vadd.f32 %v831, %v832
          %v834 = vadd.f32 %v812, %v833
          %835 = vst [vmem:[#allocation4] sm:$0x1] %v834
          %v836 = vld [vmem:[#allocation5] sm:$0x1]
          %v837 = vmul.f32 %v796, %v702
          %v838 = vmul.f32 %v797, %v705
          %v839 = vmul.f32 %v798, %v710
          %v840 = vmul.f32 %v799, %v713
          %v841 = vmul.f32 %v800, %v718
          %v842 = vmul.f32 %v801, %v721
          %v843 = vmul.f32 %v802, %v726
          %v844 = vmul.f32 %v803, %v729
          %v845 = vmul.f32 %v804, %v734
          %v846 = vmul.f32 %v805, %v737
          %v847 = vmul.f32 %v806, %v742
          %v848 = vmul.f32 %v807, %v745
          %v849 = vmul.f32 %v808, %v750
          %v850 = vmul.f32 %v809, %v753
          %v851 = vmul.f32 %v810, %v758
          %v852 = vmul.f32 %v811, %v761
          %v853 = vadd.f32 %v837, %v838
          %v854 = vadd.f32 %v853, %v839
          %v855 = vadd.f32 %v854, %v840
          %v856 = vadd.f32 %v855, %v841
          %v857 = vadd.f32 %v856, %v842
          %v858 = vadd.f32 %v857, %v843
          %v859 = vadd.f32 %v858, %v844
          %v860 = vadd.f32 %v859, %v845
          %v861 = vadd.f32 %v860, %v846
          %v862 = vadd.f32 %v861, %v847
          %v863 = vadd.f32 %v862, %v848
          %v864 = vadd.f32 %v863, %v849
          %v865 = vadd.f32 %v864, %v850
          %v866 = vadd.f32 %v865, %v851
          %v867 = vadd.f32 %v866, %v852
          %v868 = vrot.slane %v867, 4
          %v869 = vadd.f32 %v867, %v868
          %v870 = vrot.slane %v869, 2
          %v871 = vadd.f32 %v869, %v870
          %v872 = vrot.slane %v871, 1
          %v873 = vadd.f32 %v871, %v872
          %v874 = vadd.f32 %v836, %v873
          %875 = vst [vmem:[#allocation5] sm:$0x1] %v874
          %v876 = vpack.c.bf16 %v705, %v702
          %v877 = vpack.c.bf16 %v713, %v710
          %v878 = vpack.c.bf16 %v721, %v718
          %v879 = vpack.c.bf16 %v729, %v726
          %v880 = vpack.c.bf16 %v737, %v734
          %v881 = vpack.c.bf16 %v745, %v742
          %v882 = vpack.c.bf16 %v753, %v750
          %v883 = vpack.c.bf16 %v761, %v758
          %s884 = sshra.s32 %s473, 4
          %s885 = sand.u32 %s473, 15
          %s886 = smul.addr %s884, 8
          %s887 = scalar_lea.vmem [#allocation3], %s886
          %888 = vst [vmem:[%s887] sm:$0xff] %v876
          %889 = vst [vmem:[%s887 + $0x8] sm:$0xff] %v877
          %890 = vst [vmem:[%s887 + $0x10] sm:$0xff] %v878
          %891 = vst [vmem:[%s887 + $0x18] sm:$0xff] %v879
          %892 = vst [vmem:[%s887 + $0x20] sm:$0xff] %v880
          %893 = vst [vmem:[%s887 + $0x28] sm:$0xff] %v881
          %894 = vst [vmem:[%s887 + $0x30] sm:$0xff] %v882
          %895 = vst [vmem:[%s887 + $0x38] sm:$0xff] %v883
        $region88: #{gnn_forward.1} parent=55 // pred_fallthru
          _
        %p896 = scmp.gt.s32.totalorder %s30, 0
        // Predicated region
        $region89: #{gnn_forward.1} parent=55 // pred_check
          %p897 = pneg %p896
        $region90: #{gnn_forward.1} parent=55 // pred_check_branch
          %899 = sbr.rel (%p897) target = $region92
        $region91: #{gnn_forward.1} parent=55 // pred_region
          %v900 = vld [vmem:[#allocation2] sm:$0xff]
          %v901 = vld [vmem:[#allocation2 + $0x8] sm:$0xff]
          %v902 = vld [vmem:[#allocation2 + $0x10] sm:$0xff]
          %v903 = vld [vmem:[#allocation2 + $0x18] sm:$0xff]
          %v904 = vld [vmem:[#allocation2 + $0x20] sm:$0xff]
          %v905 = vld [vmem:[#allocation2 + $0x28] sm:$0xff]
          %v906 = vld [vmem:[#allocation2 + $0x30] sm:$0xff]
          %v907 = vld [vmem:[#allocation2 + $0x38] sm:$0xff]
          %s908 = sshra.s32 %s473, 4
          %s909 = sand.u32 %s473, 15
          %s910 = smul.addr %s908, 8
          %s911 = scalar_lea.vmem [#allocation2], %s910
          %v912 = vld [vmem:[%s911] sm:$0xff]
          %v913 = vld [vmem:[%s911 + $0x8] sm:$0xff]
          %v914 = vld [vmem:[%s911 + $0x10] sm:$0xff]
          %v915 = vld [vmem:[%s911 + $0x18] sm:$0xff]
          %v916 = vld [vmem:[%s911 + $0x20] sm:$0xff]
          %v917 = vld [vmem:[%s911 + $0x28] sm:$0xff]
          %v918 = vld [vmem:[%s911 + $0x30] sm:$0xff]
          %v919 = vld [vmem:[%s911 + $0x38] sm:$0xff]
          %s920 = sshra.s32 %s473, 3
          %s921 = sand.u32 %s473, 7
          %s922 = smul.addr %s920, 4
          %s923 = scalar_lea.vmem [#allocation8], %s922
          %v924 = vld [vmem:[%s923] sm:$0xf]
          %v925 = vld [vmem:[%s923 + $0x4] sm:$0xf]
          %v926 = vld [vmem:[%s923 + $0x8] sm:$0xf]
          %v927 = vld [vmem:[%s923 + $0xc] sm:$0xf]
          %v928 = vld [vmem:[%s923 + $0x10] sm:$0xf]
          %v929 = vld [vmem:[%s923 + $0x14] sm:$0xf]
          %v930 = vld [vmem:[%s923 + $0x18] sm:$0xf]
          %v931 = vld [vmem:[%s923 + $0x1c] sm:$0xf]
          %v932 = vld [vmem:[%s923 + $0x20] sm:$0xf]
          %v933 = vld [vmem:[%s923 + $0x24] sm:$0xf]
          %v934 = vld [vmem:[%s923 + $0x28] sm:$0xf]
          %v935 = vld [vmem:[%s923 + $0x2c] sm:$0xf]
          %v936 = vld [vmem:[%s923 + $0x30] sm:$0xf]
          %v937 = vld [vmem:[%s923 + $0x34] sm:$0xf]
          %v938 = vld [vmem:[%s923 + $0x38] sm:$0xf]
          %v939 = vld [vmem:[%s923 + $0x3c] sm:$0xf]
          %v956 = vunpack.c.l.b16 %v924
          %v957 = vunpack.c.l.b16 %v925
          %v958 = vunpack.c.l.b16 %v926
          %v959 = vunpack.c.l.b16 %v927
          %v960 = vunpack.c.l.b16 %v928
          %v961 = vunpack.c.l.b16 %v929
          %v962 = vunpack.c.l.b16 %v930
          %v963 = vunpack.c.l.b16 %v931
          %v964 = vunpack.c.l.b16 %v932
          %v965 = vunpack.c.l.b16 %v933
          %v966 = vunpack.c.l.b16 %v934
          %v967 = vunpack.c.l.b16 %v935
          %v968 = vunpack.c.l.b16 %v936
          %v969 = vunpack.c.l.b16 %v937
          %v970 = vunpack.c.l.b16 %v938
          %v971 = vunpack.c.l.b16 %v939
          %v972 = vpack.c.b16 %v957, %v956
          %v973 = vpack.c.b16 %v959, %v958
          %v974 = vpack.c.b16 %v961, %v960
          %v975 = vpack.c.b16 %v963, %v962
          %v976 = vpack.c.b16 %v965, %v964
          %v977 = vpack.c.b16 %v967, %v966
          %v978 = vpack.c.b16 %v969, %v968
          %v979 = vpack.c.b16 %v971, %v970
          %988 = vmatprep.subr.bf16.mxu0 0
          %989 = vmatpush1.bf16.msra.mxu0 %v900
          %990 = vmatprep.subr.bf16.mxu0 0
          %991 = vmatpush1.bf16.msra.mxu0 %v901
          %992 = vmatprep.subr.bf16.mxu0 0
          %993 = vmatpush1.bf16.msra.mxu0 %v902
          %994 = vmatprep.subr.bf16.mxu0 0
          %995 = vmatpush1.bf16.msra.mxu0 %v903
          %996 = vmatprep.subr.bf16.mxu0 0
          %997 = vmatpush1.bf16.msra.mxu0 %v904
          %998 = vmatprep.subr.bf16.mxu0 0
          %999 = vmatpush1.bf16.msra.mxu0 %v905
          %1000 = vmatprep.subr.bf16.mxu0 0
          %1001 = vmatpush1.bf16.msra.mxu0 %v906
          %1002 = vmatprep.subr.bf16.mxu0 0
          %1003 = vmatpush1.bf16.msra.mxu0 %v907
          %1004 = vmatprep.subr.bf16.mxu0 0
          %1005 = vmatpush1.bf16.msra.mxu0 0
          %1006 = vmatprep.subr.bf16.mxu0 0
          %1007 = vmatpush1.bf16.msra.mxu0 0
          %1008 = vmatprep.subr.bf16.mxu0 0
          %1009 = vmatpush1.bf16.msra.mxu0 0
          %1010 = vmatprep.subr.bf16.mxu0 0
          %1011 = vmatpush1.bf16.msra.mxu0 0
          %1012 = vmatprep.subr.bf16.mxu0 0
          %1013 = vmatpush1.bf16.msra.mxu0 0
          %1014 = vmatprep.subr.bf16.mxu0 0
          %1015 = vmatpush1.bf16.msra.mxu0 0
          %1016 = vmatprep.subr.bf16.mxu0 0
          %1017 = vmatpush1.bf16.msra.mxu0 0
          %1018 = vmatprep.subr.bf16.mxu0 0
          %1019 = vmatpush1.bf16.msra.mxu0 0
          %1020 = vmatprep.mubr.bf16.mxu0 0
          %1021 = vmatmul.mubr.bf16.gmra.mrb[0].mxu0 %v972
          %v1022 = vpop.f32.mrb[0].mxu0
          %v1023 = vadd.f32 0.0, %v1022
          %v1024 = vpop.f32.mrb[0].mxu0
          %v1025 = vpop.f32.mrb[0].mxu0
          %v1026 = vadd.f32 0.0, %v1025
          %v1027 = vpop.f32.mrb[0].mxu0
          %1028 = vmatprep.mubr.bf16.mxu0 0
          %1029 = vmatmul.mubr.bf16.gmra.mrb[0].mxu0 %v973
          %v1030 = vpop.f32.mrb[0].mxu0
          %v1031 = vadd.f32 0.0, %v1030
          %v1032 = vpop.f32.mrb[0].mxu0
          %v1033 = vpop.f32.mrb[0].mxu0
          %v1034 = vadd.f32 0.0, %v1033
          %v1035 = vpop.f32.mrb[0].mxu0
          %1036 = vmatprep.mubr.bf16.mxu0 0
          %1037 = vmatmul.mubr.bf16.gmra.mrb[0].mxu0 %v974
          %v1038 = vpop.f32.mrb[0].mxu0
          %v1039 = vadd.f32 0.0, %v1038
          %v1040 = vpop.f32.mrb[0].mxu0
          %v1041 = vpop.f32.mrb[0].mxu0
          %v1042 = vadd.f32 0.0, %v1041
          %v1043 = vpop.f32.mrb[0].mxu0
          %1044 = vmatprep.mubr.bf16.mxu0 0
          %1045 = vmatmul.mubr.bf16.gmra.mrb[0].mxu0 %v975
          %v1046 = vpop.f32.mrb[0].mxu0
          %v1047 = vadd.f32 0.0, %v1046
          %v1048 = vpop.f32.mrb[0].mxu0
          %v1049 = vpop.f32.mrb[0].mxu0
          %v1050 = vadd.f32 0.0, %v1049
          %v1051 = vpop.f32.mrb[0].mxu0
          %1052 = vmatprep.mubr.bf16.mxu0 0
          %1053 = vmatmul.mubr.bf16.gmra.mrb[0].mxu0 %v976
          %v1054 = vpop.f32.mrb[0].mxu0
          %v1055 = vadd.f32 0.0, %v1054
          %v1056 = vpop.f32.mrb[0].mxu0
          %v1057 = vpop.f32.mrb[0].mxu0
          %v1058 = vadd.f32 0.0, %v1057
          %v1059 = vpop.f32.mrb[0].mxu0
          %1060 = vmatprep.mubr.bf16.mxu0 0
          %1061 = vmatmul.mubr.bf16.gmra.mrb[0].mxu0 %v977
          %v1062 = vpop.f32.mrb[0].mxu0
          %v1063 = vadd.f32 0.0, %v1062
          %v1064 = vpop.f32.mrb[0].mxu0
          %v1065 = vpop.f32.mrb[0].mxu0
          %v1066 = vadd.f32 0.0, %v1065
          %v1067 = vpop.f32.mrb[0].mxu0
          %1068 = vmatprep.mubr.bf16.mxu0 0
          %1069 = vmatmul.mubr.bf16.gmra.mrb[0].mxu0 %v978
          %v1070 = vpop.f32.mrb[0].mxu0
          %v1071 = vadd.f32 0.0, %v1070
          %v1072 = vpop.f32.mrb[0].mxu0
          %v1073 = vpop.f32.mrb[0].mxu0
          %v1074 = vadd.f32 0.0, %v1073
          %v1075 = vpop.f32.mrb[0].mxu0
          %1076 = vmatprep.mubr.bf16.mxu0 0
          %1077 = vmatmul.mubr.bf16.gmra.mrb[0].mxu0 %v979
          %v1078 = vpop.f32.mrb[0].mxu0
          %v1079 = vadd.f32 0.0, %v1078
          %v1080 = vpop.f32.mrb[0].mxu0
          %v1081 = vpop.f32.mrb[0].mxu0
          %v1082 = vadd.f32 0.0, %v1081
          %v1083 = vpop.f32.mrb[0].mxu0
          %1084 = vdwg.mxu0
          %v1085 = vld [vmem:[%s408] sm:$0xf]
          %v1086 = vld [vmem:[%s408 + $0x4] sm:$0xf]
          %v1087 = vld [vmem:[%s408 + $0x8] sm:$0xf]
          %v1088 = vld [vmem:[%s408 + $0xc] sm:$0xf]
          %v1089 = vld [vmem:[%s408 + $0x10] sm:$0xf]
          %v1090 = vld [vmem:[%s408 + $0x14] sm:$0xf]
          %v1091 = vld [vmem:[%s408 + $0x18] sm:$0xf]
          %v1092 = vld [vmem:[%s408 + $0x1c] sm:$0xf]
          %v1093 = vld [vmem:[%s408 + $0x20] sm:$0xf]
          %v1094 = vld [vmem:[%s408 + $0x24] sm:$0xf]
          %v1095 = vld [vmem:[%s408 + $0x28] sm:$0xf]
          %v1096 = vld [vmem:[%s408 + $0x2c] sm:$0xf]
          %v1097 = vld [vmem:[%s408 + $0x30] sm:$0xf]
          %v1098 = vld [vmem:[%s408 + $0x34] sm:$0xf]
          %v1099 = vld [vmem:[%s408 + $0x38] sm:$0xf]
          %v1100 = vld [vmem:[%s408 + $0x3c] sm:$0xf]
          %v1101 = vpack.c.bf16 %v1026, %v1023
          %v1102 = vpack.c.bf16 %v1034, %v1031
          %v1103 = vpack.c.bf16 %v1042, %v1039
          %v1104 = vpack.c.bf16 %v1050, %v1047
          %v1105 = vpack.c.bf16 %v1058, %v1055
          %v1106 = vpack.c.bf16 %v1066, %v1063
          %v1107 = vpack.c.bf16 %v1074, %v1071
          %v1108 = vpack.c.bf16 %v1082, %v1079
          %v1125 = vunpack.c.l.b16 %v524
          %v1126 = vunpack.c.l.b16 %v525
          %v1127 = vunpack.c.l.b16 %v526
          %v1128 = vunpack.c.l.b16 %v527
          %v1129 = vunpack.c.l.b16 %v528
          %v1130 = vunpack.c.l.b16 %v529
          %v1131 = vunpack.c.l.b16 %v530
          %v1132 = vunpack.c.l.b16 %v531
          %v1133 = vunpack.c.l.b16 %v532
          %v1134 = vunpack.c.l.b16 %v533
          %v1135 = vunpack.c.l.b16 %v534
          %v1136 = vunpack.c.l.b16 %v535
          %v1137 = vunpack.c.l.b16 %v536
          %v1138 = vunpack.c.l.b16 %v537
          %v1139 = vunpack.c.l.b16 %v538
          %v1140 = vunpack.c.l.b16 %v539
          %v1141 = vpack.c.b16 %v1126, %v1125
          %v1142 = vpack.c.b16 %v1128, %v1127
          %v1143 = vpack.c.b16 %v1130, %v1129
          %v1144 = vpack.c.b16 %v1132, %v1131
          %v1145 = vpack.c.b16 %v1134, %v1133
          %v1146 = vpack.c.b16 %v1136, %v1135
          %v1147 = vpack.c.b16 %v1138, %v1137
          %v1148 = vpack.c.b16 %v1140, %v1139
          %1157 = vmatprep.subr.bf16.mxu0 0
          %1158 = vmatpush1.bf16.msra.mxu0 %v1141
          %1159 = vmatprep.subr.bf16.mxu0 0
          %1160 = vmatpush1.bf16.msra.mxu0 %v1142
          %1161 = vmatprep.subr.bf16.mxu0 0
          %1162 = vmatpush1.bf16.msra.mxu0 %v1143
          %1163 = vmatprep.subr.bf16.mxu0 0
          %1164 = vmatpush1.bf16.msra.mxu0 %v1144
          %1165 = vmatprep.subr.bf16.mxu0 0
          %1166 = vmatpush1.bf16.msra.mxu0 %v1145
          %1167 = vmatprep.subr.bf16.mxu0 0
          %1168 = vmatpush1.bf16.msra.mxu0 %v1146
          %1169 = vmatprep.subr.bf16.mxu0 0
          %1170 = vmatpush1.bf16.msra.mxu0 %v1147
          %1171 = vmatprep.subr.bf16.mxu0 0
          %1172 = vmatpush1.bf16.msra.mxu0 %v1148
          %1173 = vmatprep.subr.bf16.mxu0 0
          %1174 = vmatpush1.bf16.msra.mxu0 0
          %1175 = vmatprep.subr.bf16.mxu0 0
          %1176 = vmatpush1.bf16.msra.mxu0 0
          %1177 = vmatprep.subr.bf16.mxu0 0
          %1178 = vmatpush1.bf16.msra.mxu0 0
          %1179 = vmatprep.subr.bf16.mxu0 0
          %1180 = vmatpush1.bf16.msra.mxu0 0
          %1181 = vmatprep.subr.bf16.mxu0 0
          %1182 = vmatpush1.bf16.msra.mxu0 0
          %1183 = vmatprep.subr.bf16.mxu0 0
          %1184 = vmatpush1.bf16.msra.mxu0 0
          %1185 = vmatprep.subr.bf16.mxu0 0
          %1186 = vmatpush1.bf16.msra.mxu0 0
          %1187 = vmatprep.subr.bf16.mxu0 0
          %1188 = vmatpush1.bf16.msra.mxu0 0
          %1189 = vmatprep.mubr.bf16.mxu0 0
          %1190 = vmatmul.mubr.bf16.gmra.mrb[0].mxu0 %v912
          %v1191 = vpop.f32.mrb[0].mxu0
          %v1192 = vadd.f32 0.0, %v1191
          %v1193 = vpop.f32.mrb[0].mxu0
          %v1194 = vpop.f32.mrb[0].mxu0
          %v1195 = vadd.f32 0.0, %v1194
          %v1196 = vpop.f32.mrb[0].mxu0
          %1197 = vmatprep.mubr.bf16.mxu0 0
          %1198 = vmatmul.mubr.bf16.gmra.mrb[0].mxu0 %v913
          %v1199 = vpop.f32.mrb[0].mxu0
          %v1200 = vadd.f32 0.0, %v1199
          %v1201 = vpop.f32.mrb[0].mxu0
          %v1202 = vpop.f32.mrb[0].mxu0
          %v1203 = vadd.f32 0.0, %v1202
          %v1204 = vpop.f32.mrb[0].mxu0
          %1205 = vmatprep.mubr.bf16.mxu0 0
          %1206 = vmatmul.mubr.bf16.gmra.mrb[0].mxu0 %v914
          %v1207 = vpop.f32.mrb[0].mxu0
          %v1208 = vadd.f32 0.0, %v1207
          %v1209 = vpop.f32.mrb[0].mxu0
          %v1210 = vpop.f32.mrb[0].mxu0
          %v1211 = vadd.f32 0.0, %v1210
          %v1212 = vpop.f32.mrb[0].mxu0
          %1213 = vmatprep.mubr.bf16.mxu0 0
          %1214 = vmatmul.mubr.bf16.gmra.mrb[0].mxu0 %v915
          %v1215 = vpop.f32.mrb[0].mxu0
          %v1216 = vadd.f32 0.0, %v1215
          %v1217 = vpop.f32.mrb[0].mxu0
          %v1218 = vpop.f32.mrb[0].mxu0
          %v1219 = vadd.f32 0.0, %v1218
          %v1220 = vpop.f32.mrb[0].mxu0
          %1221 = vmatprep.mubr.bf16.mxu0 0
          %1222 = vmatmul.mubr.bf16.gmra.mrb[0].mxu0 %v916
          %v1223 = vpop.f32.mrb[0].mxu0
          %v1224 = vadd.f32 0.0, %v1223
          %v1225 = vpop.f32.mrb[0].mxu0
          %v1226 = vpop.f32.mrb[0].mxu0
          %v1227 = vadd.f32 0.0, %v1226
          %v1228 = vpop.f32.mrb[0].mxu0
          %1229 = vmatprep.mubr.bf16.mxu0 0
          %1230 = vmatmul.mubr.bf16.gmra.mrb[0].mxu0 %v917
          %v1231 = vpop.f32.mrb[0].mxu0
          %v1232 = vadd.f32 0.0, %v1231
          %v1233 = vpop.f32.mrb[0].mxu0
          %v1234 = vpop.f32.mrb[0].mxu0
          %v1235 = vadd.f32 0.0, %v1234
          %v1236 = vpop.f32.mrb[0].mxu0
          %1237 = vmatprep.mubr.bf16.mxu0 0
          %1238 = vmatmul.mubr.bf16.gmra.mrb[0].mxu0 %v918
          %v1239 = vpop.f32.mrb[0].mxu0
          %v1240 = vadd.f32 0.0, %v1239
          %v1241 = vpop.f32.mrb[0].mxu0
          %v1242 = vpop.f32.mrb[0].mxu0
          %v1243 = vadd.f32 0.0, %v1242
          %v1244 = vpop.f32.mrb[0].mxu0
          %1245 = vmatprep.mubr.bf16.mxu0 0
          %1246 = vmatmul.mubr.bf16.gmra.mrb[0].mxu0 %v919
          %v1247 = vpop.f32.mrb[0].mxu0
          %v1248 = vadd.f32 0.0, %v1247
          %v1249 = vpop.f32.mrb[0].mxu0
          %v1250 = vpop.f32.mrb[0].mxu0
          %v1251 = vadd.f32 0.0, %v1250
          %v1252 = vpop.f32.mrb[0].mxu0
          %1253 = vdwg.mxu0
          %v1270 = vunpack.c.l.b16 %v1085
          %v1271 = vunpack.c.l.b16 %v1086
          %v1272 = vunpack.c.l.b16 %v1087
          %v1273 = vunpack.c.l.b16 %v1088
          %v1274 = vunpack.c.l.b16 %v1089
          %v1275 = vunpack.c.l.b16 %v1090
          %v1276 = vunpack.c.l.b16 %v1091
          %v1277 = vunpack.c.l.b16 %v1092
          %v1278 = vunpack.c.l.b16 %v1093
          %v1279 = vunpack.c.l.b16 %v1094
          %v1280 = vunpack.c.l.b16 %v1095
          %v1281 = vunpack.c.l.b16 %v1096
          %v1282 = vunpack.c.l.b16 %v1097
          %v1283 = vunpack.c.l.b16 %v1098
          %v1284 = vunpack.c.l.b16 %v1099
          %v1285 = vunpack.c.l.b16 %v1100
          %v1286 = vpack.c.b16 %v1271, %v1270
          %v1287 = vpack.c.b16 %v1273, %v1272
          %v1288 = vpack.c.b16 %v1275, %v1274
          %v1289 = vpack.c.b16 %v1277, %v1276
          %v1290 = vpack.c.b16 %v1279, %v1278
          %v1291 = vpack.c.b16 %v1281, %v1280
          %v1292 = vpack.c.b16 %v1283, %v1282
          %v1293 = vpack.c.b16 %v1285, %v1284
          %1302 = vmatprep.subr.bf16.mxu0 0
          %1303 = vmatpush1.bf16.msra.mxu0 %v1286
          %1304 = vmatprep.subr.bf16.mxu0 0
          %1305 = vmatpush1.bf16.msra.mxu0 %v1287
          %1306 = vmatprep.subr.bf16.mxu0 0
          %1307 = vmatpush1.bf16.msra.mxu0 %v1288
          %1308 = vmatprep.subr.bf16.mxu0 0
          %1309 = vmatpush1.bf16.msra.mxu0 %v1289
          %1310 = vmatprep.subr.bf16.mxu0 0
          %1311 = vmatpush1.bf16.msra.mxu0 %v1290
          %1312 = vmatprep.subr.bf16.mxu0 0
          %1313 = vmatpush1.bf16.msra.mxu0 %v1291
          %1314 = vmatprep.subr.bf16.mxu0 0
          %1315 = vmatpush1.bf16.msra.mxu0 %v1292
          %1316 = vmatprep.subr.bf16.mxu0 0
          %1317 = vmatpush1.bf16.msra.mxu0 %v1293
          %1318 = vmatprep.subr.bf16.mxu0 0
          %1319 = vmatpush1.bf16.msra.mxu0 0
          %1320 = vmatprep.subr.bf16.mxu0 0
          %1321 = vmatpush1.bf16.msra.mxu0 0
          %1322 = vmatprep.subr.bf16.mxu0 0
          %1323 = vmatpush1.bf16.msra.mxu0 0
          %1324 = vmatprep.subr.bf16.mxu0 0
          %1325 = vmatpush1.bf16.msra.mxu0 0
          %1326 = vmatprep.subr.bf16.mxu0 0
          %1327 = vmatpush1.bf16.msra.mxu0 0
          %1328 = vmatprep.subr.bf16.mxu0 0
          %1329 = vmatpush1.bf16.msra.mxu0 0
          %1330 = vmatprep.subr.bf16.mxu0 0
          %1331 = vmatpush1.bf16.msra.mxu0 0
          %1332 = vmatprep.subr.bf16.mxu0 0
          %1333 = vmatpush1.bf16.msra.mxu0 0
          %1334 = vmatprep.mubr.bf16.mxu0 0
          %1335 = vmatmul.mubr.bf16.gmra.mrb[0].mxu0 %v1101
          %v1336 = vpop.f32.mrb[0].mxu0
          %v1337 = vadd.f32 %v1192, %v1336
          %v1338 = vpop.f32.mrb[0].mxu0
          %v1339 = vpop.f32.mrb[0].mxu0
          %v1340 = vadd.f32 %v1195, %v1339
          %v1341 = vpop.f32.mrb[0].mxu0
          %1342 = vmatprep.mubr.bf16.mxu0 0
          %1343 = vmatmul.mubr.bf16.gmra.mrb[0].mxu0 %v1102
          %v1344 = vpop.f32.mrb[0].mxu0
          %v1345 = vadd.f32 %v1200, %v1344
          %v1346 = vpop.f32.mrb[0].mxu0
          %v1347 = vpop.f32.mrb[0].mxu0
          %v1348 = vadd.f32 %v1203, %v1347
          %v1349 = vpop.f32.mrb[0].mxu0
          %1350 = vmatprep.mubr.bf16.mxu0 0
          %1351 = vmatmul.mubr.bf16.gmra.mrb[0].mxu0 %v1103
          %v1352 = vpop.f32.mrb[0].mxu0
          %v1353 = vadd.f32 %v1208, %v1352
          %v1354 = vpop.f32.mrb[0].mxu0
          %v1355 = vpop.f32.mrb[0].mxu0
          %v1356 = vadd.f32 %v1211, %v1355
          %v1357 = vpop.f32.mrb[0].mxu0
          %1358 = vmatprep.mubr.bf16.mxu0 0
          %1359 = vmatmul.mubr.bf16.gmra.mrb[0].mxu0 %v1104
          %v1360 = vpop.f32.mrb[0].mxu0
          %v1361 = vadd.f32 %v1216, %v1360
          %v1362 = vpop.f32.mrb[0].mxu0
          %v1363 = vpop.f32.mrb[0].mxu0
          %v1364 = vadd.f32 %v1219, %v1363
          %v1365 = vpop.f32.mrb[0].mxu0
          %1366 = vmatprep.mubr.bf16.mxu0 0
          %1367 = vmatmul.mubr.bf16.gmra.mrb[0].mxu0 %v1105
          %v1368 = vpop.f32.mrb[0].mxu0
          %v1369 = vadd.f32 %v1224, %v1368
          %v1370 = vpop.f32.mrb[0].mxu0
          %v1371 = vpop.f32.mrb[0].mxu0
          %v1372 = vadd.f32 %v1227, %v1371
          %v1373 = vpop.f32.mrb[0].mxu0
          %1374 = vmatprep.mubr.bf16.mxu0 0
          %1375 = vmatmul.mubr.bf16.gmra.mrb[0].mxu0 %v1106
          %v1376 = vpop.f32.mrb[0].mxu0
          %v1377 = vadd.f32 %v1232, %v1376
          %v1378 = vpop.f32.mrb[0].mxu0
          %v1379 = vpop.f32.mrb[0].mxu0
          %v1380 = vadd.f32 %v1235, %v1379
          %v1381 = vpop.f32.mrb[0].mxu0
          %1382 = vmatprep.mubr.bf16.mxu0 0
          %1383 = vmatmul.mubr.bf16.gmra.mrb[0].mxu0 %v1107
          %v1384 = vpop.f32.mrb[0].mxu0
          %v1385 = vadd.f32 %v1240, %v1384
          %v1386 = vpop.f32.mrb[0].mxu0
          %v1387 = vpop.f32.mrb[0].mxu0
          %v1388 = vadd.f32 %v1243, %v1387
          %v1389 = vpop.f32.mrb[0].mxu0
          %1390 = vmatprep.mubr.bf16.mxu0 0
          %1391 = vmatmul.mubr.bf16.gmra.mrb[0].mxu0 %v1108
          %v1392 = vpop.f32.mrb[0].mxu0
          %v1393 = vadd.f32 %v1248, %v1392
          %v1394 = vpop.f32.mrb[0].mxu0
          %v1395 = vpop.f32.mrb[0].mxu0
          %v1396 = vadd.f32 %v1251, %v1395
          %v1397 = vpop.f32.mrb[0].mxu0
          %1398 = vdwg.mxu0
          %v1400 = vlaneseq
          %v1401 = vshrl.u32 %v1400, 7
          %v1402 = vsub.s32 0, %v1401
          %v1403 = vrot.slane %v540, %v1402
          %v1405 = vadd.f32 %v1337, %v1403
          %v1406 = vadd.f32 %v1340, %v1403
          %v1407 = vadd.f32 %v1345, %v1403
          %v1408 = vadd.f32 %v1348, %v1403
          %v1409 = vadd.f32 %v1353, %v1403
          %v1410 = vadd.f32 %v1356, %v1403
          %v1411 = vadd.f32 %v1361, %v1403
          %v1412 = vadd.f32 %v1364, %v1403
          %v1413 = vadd.f32 %v1369, %v1403
          %v1414 = vadd.f32 %v1372, %v1403
          %v1415 = vadd.f32 %v1377, %v1403
          %v1416 = vadd.f32 %v1380, %v1403
          %v1417 = vadd.f32 %v1385, %v1403
          %v1418 = vadd.f32 %v1388, %v1403
          %v1419 = vadd.f32 %v1393, %v1403
          %v1420 = vadd.f32 %v1396, %v1403
          %v1421 = vsel %vm508, 1, 0
          %v1422 = vsel %vm509, 1, 0
          %v1423 = vsel %vm510, 1, 0
          %v1424 = vsel %vm511, 1, 0
          %v1425 = vsel %vm512, 1, 0
          %v1426 = vsel %vm513, 1, 0
          %v1427 = vsel %vm514, 1, 0
          %v1428 = vsel %vm515, 1, 0
          %v1429 = vsel %vm516, 1, 0
          %v1430 = vsel %vm517, 1, 0
          %v1431 = vsel %vm518, 1, 0
          %v1432 = vsel %vm519, 1, 0
          %v1433 = vsel %vm520, 1, 0
          %v1434 = vsel %vm521, 1, 0
          %v1435 = vsel %vm522, 1, 0
          %v1436 = vsel %vm523, 1, 0
          %vm1437 = vcmp.eq.s32.totalorder %v1421, 1
          %vm1438 = vcmp.eq.s32.totalorder %v1422, 1
          %vm1439 = vcmp.eq.s32.totalorder %v1423, 1
          %vm1440 = vcmp.eq.s32.totalorder %v1424, 1
          %vm1441 = vcmp.eq.s32.totalorder %v1425, 1
          %vm1442 = vcmp.eq.s32.totalorder %v1426, 1
          %vm1443 = vcmp.eq.s32.totalorder %v1427, 1
          %vm1444 = vcmp.eq.s32.totalorder %v1428, 1
          %vm1445 = vcmp.eq.s32.totalorder %v1429, 1
          %vm1446 = vcmp.eq.s32.totalorder %v1430, 1
          %vm1447 = vcmp.eq.s32.totalorder %v1431, 1
          %vm1448 = vcmp.eq.s32.totalorder %v1432, 1
          %vm1449 = vcmp.eq.s32.totalorder %v1433, 1
          %vm1450 = vcmp.eq.s32.totalorder %v1434, 1
          %vm1451 = vcmp.eq.s32.totalorder %v1435, 1
          %vm1452 = vcmp.eq.s32.totalorder %v1436, 1
          %v1453 = vsel %vm1437, %v1405, 0.0
          %v1454 = vsel %vm1438, %v1406, 0.0
          %v1455 = vsel %vm1439, %v1407, 0.0
          %v1456 = vsel %vm1440, %v1408, 0.0
          %v1457 = vsel %vm1441, %v1409, 0.0
          %v1458 = vsel %vm1442, %v1410, 0.0
          %v1459 = vsel %vm1443, %v1411, 0.0
          %v1460 = vsel %vm1444, %v1412, 0.0
          %v1461 = vsel %vm1445, %v1413, 0.0
          %v1462 = vsel %vm1446, %v1414, 0.0
          %v1463 = vsel %vm1447, %v1415, 0.0
          %v1464 = vsel %vm1448, %v1416, 0.0
          %v1465 = vsel %vm1449, %v1417, 0.0
          %v1466 = vsel %vm1450, %v1418, 0.0
          %v1467 = vsel %vm1451, %v1419, 0.0
          %v1468 = vsel %vm1452, %v1420, 0.0
          %v1469 = vld [vmem:[#allocation4] sm:$0x1]
          %v1470 = vadd.f32 %v1453, %v1454
          %v1471 = vadd.f32 %v1470, %v1455
          %v1472 = vadd.f32 %v1471, %v1456
          %v1473 = vadd.f32 %v1472, %v1457
          %v1474 = vadd.f32 %v1473, %v1458
          %v1475 = vadd.f32 %v1474, %v1459
          %v1476 = vadd.f32 %v1475, %v1460
          %v1477 = vadd.f32 %v1476, %v1461
          %v1478 = vadd.f32 %v1477, %v1462
          %v1479 = vadd.f32 %v1478, %v1463
          %v1480 = vadd.f32 %v1479, %v1464
          %v1481 = vadd.f32 %v1480, %v1465
          %v1482 = vadd.f32 %v1481, %v1466
          %v1483 = vadd.f32 %v1482, %v1467
          %v1484 = vadd.f32 %v1483, %v1468
          %v1485 = vrot.slane %v1484, 4
          %v1486 = vadd.f32 %v1484, %v1485
          %v1487 = vrot.slane %v1486, 2
          %v1488 = vadd.f32 %v1486, %v1487
          %v1489 = vrot.slane %v1488, 1
          %v1490 = vadd.f32 %v1488, %v1489
          %v1491 = vadd.f32 %v1469, %v1490
          %1492 = vst [vmem:[#allocation4] sm:$0x1] %v1491
          %v1493 = vld [vmem:[#allocation5] sm:$0x1]
          %v1494 = vmul.f32 %v1453, %v1405
          %v1495 = vmul.f32 %v1454, %v1406
          %v1496 = vmul.f32 %v1455, %v1407
          %v1497 = vmul.f32 %v1456, %v1408
          %v1498 = vmul.f32 %v1457, %v1409
          %v1499 = vmul.f32 %v1458, %v1410
          %v1500 = vmul.f32 %v1459, %v1411
          %v1501 = vmul.f32 %v1460, %v1412
          %v1502 = vmul.f32 %v1461, %v1413
          %v1503 = vmul.f32 %v1462, %v1414
          %v1504 = vmul.f32 %v1463, %v1415
          %v1505 = vmul.f32 %v1464, %v1416
          %v1506 = vmul.f32 %v1465, %v1417
          %v1507 = vmul.f32 %v1466, %v1418
          %v1508 = vmul.f32 %v1467, %v1419
          %v1509 = vmul.f32 %v1468, %v1420
          %v1510 = vadd.f32 %v1494, %v1495
          %v1511 = vadd.f32 %v1510, %v1496
          %v1512 = vadd.f32 %v1511, %v1497
          %v1513 = vadd.f32 %v1512, %v1498
          %v1514 = vadd.f32 %v1513, %v1499
          %v1515 = vadd.f32 %v1514, %v1500
          %v1516 = vadd.f32 %v1515, %v1501
          %v1517 = vadd.f32 %v1516, %v1502
          %v1518 = vadd.f32 %v1517, %v1503
          %v1519 = vadd.f32 %v1518, %v1504
          %v1520 = vadd.f32 %v1519, %v1505
          %v1521 = vadd.f32 %v1520, %v1506
          %v1522 = vadd.f32 %v1521, %v1507
          %v1523 = vadd.f32 %v1522, %v1508
          %v1524 = vadd.f32 %v1523, %v1509
          %v1525 = vrot.slane %v1524, 4
          %v1526 = vadd.f32 %v1524, %v1525
          %v1527 = vrot.slane %v1526, 2
          %v1528 = vadd.f32 %v1526, %v1527
          %v1529 = vrot.slane %v1528, 1
          %v1530 = vadd.f32 %v1528, %v1529
          %v1531 = vadd.f32 %v1493, %v1530
          %1532 = vst [vmem:[#allocation5] sm:$0x1] %v1531
          %v1533 = vpack.c.bf16 %v1406, %v1405
          %v1534 = vpack.c.bf16 %v1408, %v1407
          %v1535 = vpack.c.bf16 %v1410, %v1409
          %v1536 = vpack.c.bf16 %v1412, %v1411
          %v1537 = vpack.c.bf16 %v1414, %v1413
          %v1538 = vpack.c.bf16 %v1416, %v1415
          %v1539 = vpack.c.bf16 %v1418, %v1417
          %v1540 = vpack.c.bf16 %v1420, %v1419
          %s1541 = smul.addr %s908, 8
          %s1542 = scalar_lea.vmem [#allocation3], %s1541
          %1543 = vst [vmem:[%s1542] sm:$0xff] %v1533
          %1544 = vst [vmem:[%s1542 + $0x8] sm:$0xff] %v1534
          %1545 = vst [vmem:[%s1542 + $0x10] sm:$0xff] %v1535
          %1546 = vst [vmem:[%s1542 + $0x18] sm:$0xff] %v1536
          %1547 = vst [vmem:[%s1542 + $0x20] sm:$0xff] %v1537
          %1548 = vst [vmem:[%s1542 + $0x28] sm:$0xff] %v1538
          %1549 = vst [vmem:[%s1542 + $0x30] sm:$0xff] %v1539
          %1550 = vst [vmem:[%s1542 + $0x38] sm:$0xff] %v1540
        $region92: #{gnn_forward.1} parent=55 // pred_fallthru
          _
        // Predicated region
        $region93: #{gnn_forward.1} parent=55 // pred_check
          %p1551 = pneg %p467
        $region94: #{gnn_forward.1} parent=55 // pred_check_branch
          %1553 = sbr.rel (%p1551) target = $region96
        $region95: #{gnn_forward.1} parent=55 // pred_region
          %v1554 = vld [vmem:[#allocation4] sm:$0x1]
          %v1555 = vmul.f32 %v1554, 0.125
          %v1556 = vld [vmem:[#allocation5] sm:$0x1]
          %v1557 = vmul.f32 %v1556, 0.125
          %v1558 = vmul.f32 %v1555, %v1555
          %v1559 = vsub.f32 %v1557, %v1558
          %v1560 = vmax.f32 %v1559, 0.0
          %v1561 = vadd.f32 %v1560, 1e-05
          %v1562 = vrsqrt.pop %v1561
          %v1563 = vld [vmem:[%s465] sm:$0x1]
          %v1564 = vmul.f32 %v1562, %v1563
          %v1565 = vld [vmem:[%s416] sm:$0x1]
          %v1566 = vmul.f32 %v1555, %v1564
          %v1567 = vsub.f32 %v1565, %v1566
          %v1568 = vld [vmem:[#allocation3] sm:$0xff]
          %v1569 = vld [vmem:[#allocation3 + $0x8] sm:$0xff]
          %v1570 = vld [vmem:[#allocation3 + $0x10] sm:$0xff]
          %v1571 = vld [vmem:[#allocation3 + $0x18] sm:$0xff]
          %v1572 = vld [vmem:[#allocation3 + $0x20] sm:$0xff]
          %v1573 = vld [vmem:[#allocation3 + $0x28] sm:$0xff]
          %v1574 = vld [vmem:[#allocation3 + $0x30] sm:$0xff]
          %v1575 = vld [vmem:[#allocation3 + $0x38] sm:$0xff]
          %v1576 = vunpack.c.l.bf16 %v1568
          %v1577 = vunpack.c.h.bf16 %v1568
          %v1578 = vunpack.c.l.bf16 %v1569
          %v1579 = vunpack.c.h.bf16 %v1569
          %v1580 = vunpack.c.l.bf16 %v1570
          %v1581 = vunpack.c.h.bf16 %v1570
          %v1582 = vunpack.c.l.bf16 %v1571
          %v1583 = vunpack.c.h.bf16 %v1571
          %v1584 = vunpack.c.l.bf16 %v1572
          %v1585 = vunpack.c.h.bf16 %v1572
          %v1586 = vunpack.c.l.bf16 %v1573
          %v1587 = vunpack.c.h.bf16 %v1573
          %v1588 = vunpack.c.l.bf16 %v1574
          %v1589 = vunpack.c.h.bf16 %v1574
          %v1590 = vunpack.c.l.bf16 %v1575
          %v1591 = vunpack.c.h.bf16 %v1575
          %v1593 = vlaneseq
          %v1594 = vshrl.u32 %v1593, 7
          %v1595 = vsub.s32 0, %v1594
          %v1596 = vrot.slane %v1564, %v1595
          %v1598 = vmul.f32 %v1576, %v1596
          %v1599 = vmul.f32 %v1577, %v1596
          %v1600 = vmul.f32 %v1578, %v1596
          %v1601 = vmul.f32 %v1579, %v1596
          %v1602 = vmul.f32 %v1580, %v1596
          %v1603 = vmul.f32 %v1581, %v1596
          %v1604 = vmul.f32 %v1582, %v1596
          %v1605 = vmul.f32 %v1583, %v1596
          %v1606 = vmul.f32 %v1584, %v1596
          %v1607 = vmul.f32 %v1585, %v1596
          %v1608 = vmul.f32 %v1586, %v1596
          %v1609 = vmul.f32 %v1587, %v1596
          %v1610 = vmul.f32 %v1588, %v1596
          %v1611 = vmul.f32 %v1589, %v1596
          %v1612 = vmul.f32 %v1590, %v1596
          %v1613 = vmul.f32 %v1591, %v1596
          %v1615 = vlaneseq
          %v1616 = vshrl.u32 %v1615, 7
          %v1617 = vsub.s32 0, %v1616
          %v1618 = vrot.slane %v1567, %v1617
          %v1620 = vadd.f32 %v1598, %v1618
          %v1621 = vadd.f32 %v1599, %v1618
          %v1622 = vadd.f32 %v1600, %v1618
          %v1623 = vadd.f32 %v1601, %v1618
          %v1624 = vadd.f32 %v1602, %v1618
          %v1625 = vadd.f32 %v1603, %v1618
          %v1626 = vadd.f32 %v1604, %v1618
          %v1627 = vadd.f32 %v1605, %v1618
          %v1628 = vadd.f32 %v1606, %v1618
          %v1629 = vadd.f32 %v1607, %v1618
          %v1630 = vadd.f32 %v1608, %v1618
          %v1631 = vadd.f32 %v1609, %v1618
          %v1632 = vadd.f32 %v1610, %v1618
          %v1633 = vadd.f32 %v1611, %v1618
          %v1634 = vadd.f32 %v1612, %v1618
          %v1635 = vadd.f32 %v1613, %v1618
          %v1636 = vmax.f32 %v1620, 0.0
          %v1637 = vmax.f32 %v1621, 0.0
          %v1638 = vmax.f32 %v1622, 0.0
          %v1639 = vmax.f32 %v1623, 0.0
          %v1640 = vmax.f32 %v1624, 0.0
          %v1641 = vmax.f32 %v1625, 0.0
          %v1642 = vmax.f32 %v1626, 0.0
          %v1643 = vmax.f32 %v1627, 0.0
          %v1644 = vmax.f32 %v1628, 0.0
          %v1645 = vmax.f32 %v1629, 0.0
          %v1646 = vmax.f32 %v1630, 0.0
          %v1647 = vmax.f32 %v1631, 0.0
          %v1648 = vmax.f32 %v1632, 0.0
          %v1649 = vmax.f32 %v1633, 0.0
          %v1650 = vmax.f32 %v1634, 0.0
          %v1651 = vmax.f32 %v1635, 0.0
          %v1652 = vpack.c.bf16 %v1637, %v1636
          %v1653 = vpack.c.bf16 %v1639, %v1638
          %v1654 = vpack.c.bf16 %v1641, %v1640
          %v1655 = vpack.c.bf16 %v1643, %v1642
          %v1656 = vpack.c.bf16 %v1645, %v1644
          %v1657 = vpack.c.bf16 %v1647, %v1646
          %v1658 = vpack.c.bf16 %v1649, %v1648
          %v1659 = vpack.c.bf16 %v1651, %v1650
          %1660 = vst [vmem:[#allocation2] sm:$0xff] %v1652
          %1661 = vst [vmem:[#allocation2 + $0x8] sm:$0xff] %v1653
          %1662 = vst [vmem:[#allocation2 + $0x10] sm:$0xff] %v1654
          %1663 = vst [vmem:[#allocation2 + $0x18] sm:$0xff] %v1655
          %1664 = vst [vmem:[#allocation2 + $0x20] sm:$0xff] %v1656
          %1665 = vst [vmem:[#allocation2 + $0x28] sm:$0xff] %v1657
          %1666 = vst [vmem:[#allocation2 + $0x30] sm:$0xff] %v1658
          %1667 = vst [vmem:[#allocation2 + $0x38] sm:$0xff] %v1659
          %p1668 = scmp.eq.s32.totalorder %s30, 5
          // Predicated region
          $region97: #{gnn_forward.1} parent=95 // pred_check
            %p1669 = pneg %p1668
          $region98: #{gnn_forward.1} parent=95 // pred_check_branch
            %1671 = sbr.rel (%p1669) target = $region100
          $region99: #{gnn_forward.1} parent=95 // pred_region
            %v1672 = vld [vmem:[#allocation10] sm:$0xf]
            %1673 = vmatprep.subr.bf16.mxu0 0
            %1674 = vmatpush1.bf16.msra.mxu0 %v1652
            %1675 = vmatprep.subr.bf16.mxu0 0
            %1676 = vmatpush1.bf16.msra.mxu0 %v1653
            %1677 = vmatprep.subr.bf16.mxu0 0
            %1678 = vmatpush1.bf16.msra.mxu0 %v1654
            %1679 = vmatprep.subr.bf16.mxu0 0
            %1680 = vmatpush1.bf16.msra.mxu0 %v1655
            %1681 = vmatprep.subr.bf16.mxu0 0
            %1682 = vmatpush1.bf16.msra.mxu0 %v1656
            %1683 = vmatprep.subr.bf16.mxu0 0
            %1684 = vmatpush1.bf16.msra.mxu0 %v1657
            %1685 = vmatprep.subr.bf16.mxu0 0
            %1686 = vmatpush1.bf16.msra.mxu0 %v1658
            %1687 = vmatprep.subr.bf16.mxu0 0
            %1688 = vmatpush1.bf16.msra.mxu0 %v1659
            %1689 = vmatprep.subr.bf16.mxu0 0
            %1690 = vmatpush1.bf16.msra.mxu0 0
            %1691 = vmatprep.subr.bf16.mxu0 0
            %1692 = vmatpush1.bf16.msra.mxu0 0
            %1693 = vmatprep.subr.bf16.mxu0 0
            %1694 = vmatpush1.bf16.msra.mxu0 0
            %1695 = vmatprep.subr.bf16.mxu0 0
            %1696 = vmatpush1.bf16.msra.mxu0 0
            %1697 = vmatprep.subr.bf16.mxu0 0
            %1698 = vmatpush1.bf16.msra.mxu0 0
            %1699 = vmatprep.subr.bf16.mxu0 0
            %1700 = vmatpush1.bf16.msra.mxu0 0
            %1701 = vmatprep.subr.bf16.mxu0 0
            %1702 = vmatpush1.bf16.msra.mxu0 0
            %1703 = vmatprep.subr.bf16.mxu0 0
            %1704 = vmatpush1.bf16.msra.mxu0 0
            %1705 = vmatprep.mubr.bf16.mxu0 0
            %1706 = vmatmul.mubr.bf16.gmra.mrb[0].mxu0 %v1672
            %v1707 = vpop.f32.mrb[0].mxu0
            %v1708 = vadd.f32 0.0, %v1707
            %v1709 = vpop.f32.mrb[0].mxu0
            %v1710 = vpop.f32.mrb[0].mxu0
            %v1711 = vpop.f32.mrb[0].mxu0
            %1712 = vdwg.mxu0
            %v1713 = vld [vmem:[#allocation14] sm:$0xff]
            %v1714 = vld [vmem:[#allocation14 + $0x8] sm:$0xff]
            %v1715 = vld [vmem:[#allocation14 + $0x10] sm:$0xff]
            %v1716 = vld [vmem:[#allocation14 + $0x18] sm:$0xff]
            %v1717 = vld [vmem:[#allocation14 + $0x20] sm:$0xff]
            %v1718 = vld [vmem:[#allocation14 + $0x28] sm:$0xff]
            %v1719 = vld [vmem:[#allocation14 + $0x30] sm:$0xff]
            %v1720 = vld [vmem:[#allocation14 + $0x38] sm:$0xff]
            %v1721 = vld [vmem:[#allocation14 + $0x40] sm:$0xff]
            %v1722 = vld [vmem:[#allocation14 + $0x48] sm:$0xff]
            %v1723 = vld [vmem:[#allocation14 + $0x50] sm:$0xff]
            %v1724 = vld [vmem:[#allocation14 + $0x58] sm:$0xff]
            %v1725 = vld [vmem:[#allocation14 + $0x60] sm:$0xff]
            %v1726 = vld [vmem:[#allocation14 + $0x68] sm:$0xff]
            %v1727 = vld [vmem:[#allocation14 + $0x70] sm:$0xff]
            %v1728 = vld [vmem:[#allocation14 + $0x78] sm:$0xff]
            %v1729 = vld [vmem:[%s8] sm:$0x1]
            %v1731 = vlaneseq
            %v1732 = vshrl.u32 %v1731, 7
            %v1733 = vsub.s32 0, %v1732
            %v1734 = vrot.slane %v1729, %v1733
            %1736 = vmatprep.subr.mxu0 0.0
            %1737 = vmatpush1.msra.mxu0 %v1713
            %1738 = vmatprep.subr.mxu0 0.0
            %1739 = vmatpush1.msra.mxu0 %v1714
            %1740 = vmatprep.subr.mxu0 0.0
            %1741 = vmatpush1.msra.mxu0 %v1715
            %1742 = vmatprep.subr.mxu0 0.0
            %1743 = vmatpush1.msra.mxu0 %v1716
            %1744 = vmatprep.subr.mxu0 0.0
            %1745 = vmatpush1.msra.mxu0 %v1717
            %1746 = vmatprep.subr.mxu0 0.0
            %1747 = vmatpush1.msra.mxu0 %v1718
            %1748 = vmatprep.subr.mxu0 0.0
            %1749 = vmatpush1.msra.mxu0 %v1719
            %1750 = vmatprep.subr.mxu0 0.0
            %1751 = vmatpush1.msra.mxu0 %v1720
            %1752 = vmatprep.subr.mxu0 0.0
            %1753 = vmatpush1.msra.mxu0 %v1721
            %1754 = vmatprep.subr.mxu0 0.0
            %1755 = vmatpush1.msra.mxu0 %v1722
            %1756 = vmatprep.subr.mxu0 0.0
            %1757 = vmatpush1.msra.mxu0 %v1723
            %1758 = vmatprep.subr.mxu0 0.0
            %1759 = vmatpush1.msra.mxu0 %v1724
            %1760 = vmatprep.subr.mxu0 0.0
            %1761 = vmatpush1.msra.mxu0 %v1725
            %1762 = vmatprep.subr.mxu0 0.0
            %1763 = vmatpush1.msra.mxu0 %v1726
            %1764 = vmatprep.subr.mxu0 0.0
            %1765 = vmatpush1.msra.mxu0 %v1727
            %1766 = vmatprep.subr.mxu0 0.0
            %1767 = vmatpush1.msra.mxu0 %v1728
            %1768 = vmatprep.subr.mxu0 0.0
            %1769 = vmatpush1.msra.mxu0 0.0
            %1770 = vmatprep.subr.mxu0 0.0
            %1771 = vmatpush1.msra.mxu0 0.0
            %1772 = vmatprep.subr.mxu0 0.0
            %1773 = vmatpush1.msra.mxu0 0.0
            %1774 = vmatprep.subr.mxu0 0.0
            %1775 = vmatpush1.msra.mxu0 0.0
            %1776 = vmatprep.subr.mxu0 0.0
            %1777 = vmatpush1.msra.mxu0 0.0
            %1778 = vmatprep.subr.mxu0 0.0
            %1779 = vmatpush1.msra.mxu0 0.0
            %1780 = vmatprep.subr.mxu0 0.0
            %1781 = vmatpush1.msra.mxu0 0.0
            %1782 = vmatprep.subr.mxu0 0.0
            %1783 = vmatpush1.msra.mxu0 0.0
            %1784 = vmatprep.subr.mxu0 0.0
            %1785 = vmatpush1.msra.mxu0 0.0
            %1786 = vmatprep.subr.mxu0 0.0
            %1787 = vmatpush1.msra.mxu0 0.0
            %1788 = vmatprep.subr.mxu0 0.0
            %1789 = vmatpush1.msra.mxu0 0.0
            %1790 = vmatprep.subr.mxu0 0.0
            %1791 = vmatpush1.msra.mxu0 0.0
            %1792 = vmatprep.subr.mxu0 0.0
            %1793 = vmatpush1.msra.mxu0 0.0
            %1794 = vmatprep.subr.mxu0 0.0
            %1795 = vmatpush1.msra.mxu0 0.0
            %1796 = vmatprep.subr.mxu0 0.0
            %1797 = vmatpush1.msra.mxu0 0.0
            %1798 = vmatprep.subr.mxu0 0.0
            %1799 = vmatpush1.msra.mxu0 0.0
            %1800 = vmatprep.mubr.f32.mxu0 0.0
            %1801 = vmatmul.mubr.f32.gmra.mrb[0].mxu0 %v1708
            %v1802 = vpop.f32.mrb[0].mxu0
            %v1803 = vadd.f32 %v1734, %v1802
            %v1804 = vpop.f32.mrb[0].mxu0
            %1805 = vdwg.mxu0
            %1806 = vst [vmem:[%s9] sm:$0xff] %v1803
          $region100: #{gnn_forward.1} parent=95 // pred_fallthru
            _
        $region96: #{gnn_forward.1} parent=55 // pred_fallthru
          _
        // Predicated region
        $region101: #{gnn_forward.1} parent=55 // pred_check
          %p1807 = pneg %p260
        $region102: #{gnn_forward.1} parent=55 // pred_check_branch
          %1809 = sbr.rel (%p1807) target = $region104
        $region103: #{gnn_forward.1} parent=55 // pred_region
          _
        $region104: #{gnn_forward.1} parent=55 // pred_fallthru
          _
        // Predicated region
        $region105: #{gnn_forward.1} parent=55 // pred_check
          %p1810 = pneg %p260
        $region106: #{gnn_forward.1} parent=55 // pred_check_branch
          %1812 = sbr.rel (%p1810) target = $region108
        $region107: #{gnn_forward.1} parent=55 // pred_region
          _
        $region108: #{gnn_forward.1} parent=55 // pred_fallthru
          _
      $region56: #{gnn_forward.1} parent=5 // pred_fallthru
        _
      %p1813 = scmp.le.s32.totalorder 2, %s21
      // Predicated region
      $region109: #{gnn_forward.1} parent=5 // pred_check
        %p1814 = pneg %p1813
      $region110: #{gnn_forward.1} parent=5 // pred_check_branch
        %1816 = sbr.rel (%p1814) target = $region112
      $region111: #{gnn_forward.1} parent=5 // pred_region
        %s1817 = ssub.s32 %s21, 2
      $region112: #{gnn_forward.1} parent=5 // pred_fallthru
        _
    $region6: #{gnn_forward.1} parent=1 // loop_footer
      %s25 = sadd.s32 1, %s21
    $region7: #{gnn_forward.1} parent=1 // loop_footer_branch
      %20 = sbr.rel target = $region3
    $region8: #{gnn_forward.1} parent=1 // loop_exit
      _
    %1818 = vsyncpa [#allocation7], 1
    %s1819 = scalar_lea.sflag [#allocation7], 1
    %1820 = vsyncpa %s1819, 1
    %1821 = vsyncpa [#allocation9], 1
    %1822 = vsyncpa [#allocation12], 1
    %s1823 = scalar_lea.sflag [#allocation12], 1
    %1824 = vsyncpa %s1823, 1
    %1825 = vsyncpa [#allocation15], 1

</llo_original>
